<compile_context>
chip_gen: v7x
topology: tpu7x:2x2x1
jax: 0.10.0
libtpu: 0.0.40
codegen_flags: <defaults>
</compile_context>

<pallas_src>
import jax
import jax.numpy as jnp
from jax.experimental import pallas as pl
from jax.experimental.pallas import tpu as pltpu

# hyper-parameters (small, consistent with the module's forward)
BATCH = 2
SEQ_LEN = 8
INPUT_SIZE = 8
HIDDEN_SIZE = 32
NUM_LAYERS = 2        # kernel fuses exactly 2 stacked layers (wavefront)
N_FUTURE = 4          # the `n_future` global used by the original forward()


# -----------------------------------------------------------------------------
# Pallas kernel (single invocation, everything VMEM-resident, fully unrolled)
# -----------------------------------------------------------------------------
def _make_lstm_fc_kernel(batch, seq_len, hidden_size, n_future):
    B, T, H, F = batch, seq_len, hidden_size, n_future

    def cell(gates, c):
        # gates laid out [i | f | o | g] along lanes: one 96-lane sigmoid and
        # one 32-lane tanh (2 EUP pushes per step). All f32.
        sig = jax.nn.sigmoid(gates[:, : 3 * H])
        g_g = jnp.tanh(gates[:, 3 * H:])
        i_g = sig[:, 0:H]
        f_g = sig[:, H:2 * H]
        o_g = sig[:, 2 * H:3 * H]
        c_new = f_g * c + i_g * g_g
        h_new = o_g * jnp.tanh(c_new)
        return h_new, c_new

    def kernel(x_ref, w_ih0_ref, w_hh0_ref, b0_ref, w1_ref, b1_ref,
               w_fc_ref, b_fc_ref, out_ref):
        # ---- layer-0 input projection for ALL timesteps: one bf16 MXU issue
        d_in = x_ref.shape[-1]
        x_flat = x_ref[...].reshape(B * T, d_in).astype(jnp.bfloat16)
        proj0 = (
            jnp.dot(x_flat, w_ih0_ref[...], preferred_element_type=jnp.float32)
            + b0_ref[...]
        ).reshape(B, T, 4 * H)                                   # (B, T, 4H) f32

        w_hh0 = w_hh0_ref[...]          # (H, 4H)  bf16
        w1 = w1_ref[...]                # (2H, 4H) bf16, rows = [W_ih1; W_hh1]
        b1 = b1_ref[...]                # (1, 4H)  f32
        w_fc = w_fc_ref[...]            # (1, H)   f32

        zeros = jnp.zeros((B, H), jnp.float32)
        # Prime the wavefront: layer-0 step 0 (h0_prev = 0 -> no recurrent dot)
        h0, c0 = cell(proj0[:, 0, :], zeros)
        h1, c1 = zeros, zeros

        y_cols = []
        for t in range(T):                                       # static unroll
            h0_t = h0
            # layer-0 step t+1 — independent of layer-1 step t below, so the
            # two per-step MXU->EUP->VPU chains can overlap inside bundles.
            if t + 1 < T:
                gates0 = proj0[:, t + 1, :] + jnp.dot(
                    h0_t.astype(jnp.bfloat16), w_hh0,
                    preferred_element_type=jnp.float32)          # (B, 4H)
                h0, c0 = cell(gates0, c0)

            # layer-1 step t: fused input + recurrent projection
            lhs1 = jnp.concatenate([h0_t, h1], axis=-1).astype(jnp.bfloat16)
            gates1 = jnp.dot(lhs1, w1,
                             preferred_element_type=jnp.float32) + b1
            h1, c1 = cell(gates1, c1)

            # Online FC head on the last n_future steps: keeps h in vregs, no
            # per-step VMEM stores, no (B, T, H) history materialization.
            if t >= T - F:
                y_cols.append(jnp.sum(h1 * w_fc, axis=-1, keepdims=True))

        out_ref[...] = jnp.concatenate(y_cols, axis=1) + b_fc_ref[...]

    return kernel


# -----------------------------------------------------------------------------
# One-time weight preparation (outside the jitted forward path)
# -----------------------------------------------------------------------------
def _permute_gates(w, H):
    """PyTorch gate order [i, f, g, o] -> kernel order [i, f, o, g] (last axis)."""
    i = w[..., 0:H]
    f = w[..., H:2 * H]
    g = w[..., 2 * H:3 * H]
    o = w[..., 3 * H:4 * H]
    return jnp.concatenate([i, f, o, g], axis=-1)


def prepare_params(params):
    """Gate-permute, stack layer-1 weights, cast MXU operands to bf16, and
    transpose the FC weight.  Call once; the jitted forward takes the result."""
    assert NUM_LAYERS == 2, "kernel wavefront-fuses exactly 2 stacked layers"
    w_ih_list, w_hh_list, b_list, w_fc, b_fc = params
    H = HIDDEN_SIZE
    w_ih0 = _permute_gates(w_ih_list[0], H).astype(jnp.bfloat16)       # (D, 4H)
    w_hh0 = _permute_gates(w_hh_list[0], H).astype(jnp.bfloat16)       # (H, 4H)
    b0 = _permute_gates(b_list[0], H).astype(jnp.float32)              # (1, 4H)
    w1 = _permute_gates(
        jnp.concatenate([w_ih_list[1], w_hh_list[1]], axis=0), H
    ).astype(jnp.bfloat16)                                             # (2H, 4H)
    b1 = _permute_gates(b_list[1], H).astype(jnp.float32)              # (1, 4H)
    w_fc_row = jnp.transpose(w_fc).astype(jnp.float32)                 # (1, H)
    b_fc_k = b_fc.astype(jnp.float32)                                  # (1, 1)
    return (w_ih0, w_hh0, b0, w1, b1, w_fc_row, b_fc_k)


# -----------------------------------------------------------------------------
# Forward wrapper
# -----------------------------------------------------------------------------
def lstm_model_forward(x, prepped):
    """x: (B, T, D) batch-first -> (B, N_FUTURE, 1)."""
    B, T, _ = x.shape
    kernel = _make_lstm_fc_kernel(B, T, HIDDEN_SIZE, N_FUTURE)
    n_in = 1 + len(prepped)
    y = pl.pallas_call(
        kernel,
        out_shape=jax.ShapeDtypeStruct((B, N_FUTURE), jnp.float32),
        in_specs=[pl.BlockSpec(memory_space=pltpu.MemorySpace.VMEM)
                  for _ in range(n_in)],
        out_specs=pl.BlockSpec(memory_space=pltpu.MemorySpace.VMEM),
    )(x, *prepped)
    # match the PyTorch module's (B, n_future, 1) output
    return y[..., None]


lstm_model_forward_jit = jax.jit(lstm_model_forward)


# -----------------------------------------------------------------------------
# Pure-JAX reference (PyTorch semantics, all f32, for correctness check)
# -----------------------------------------------------------------------------
def lstm_model_ref(x, params):
    w_ih_list, w_hh_list, b_list, w_fc, b_fc = params
    B, T, _ = x.shape
    L = len(w_ih_list)
    H = HIDDEN_SIZE
    h = [jnp.zeros((B, H), jnp.float32) for _ in range(L)]
    c = [jnp.zeros((B, H), jnp.float32) for _ in range(L)]
    outs = []
    for t in range(T):
        inp = x[:, t, :]
        for l in range(L):
            gates = inp @ w_ih_list[l] + h[l] @ w_hh_list[l] + b_list[l]
            i = jax.nn.sigmoid(gates[:, 0:H])
            f = jax.nn.sigmoid(gates[:, H:2 * H])
            g = jnp.tanh(gates[:, 2 * H:3 * H])
            o = jax.nn.sigmoid(gates[:, 3 * H:4 * H])
            c[l] = f * c[l] + i * g
            h[l] = o * jnp.tanh(c[l])
            inp = h[l]
        outs.append(inp)
    out = jnp.stack(outs, axis=1)
    out = out[:, -N_FUTURE:, :]
    return out @ w_fc + b_fc


# -----------------------------------------------------------------------------
# Deterministic parameter init (PyTorch-style uniform(-1/sqrt(H), 1/sqrt(H)),
# stored as (in_dim, 4H) with PyTorch gate order [i, f, g, o])
# -----------------------------------------------------------------------------
def init_params(key):
    H = HIDDEN_SIZE
    bound = 1.0 / jnp.sqrt(jnp.float32(H))
    w_ih_list, w_hh_list, b_list = [], [], []
    for l in range(NUM_LAYERS):
        d_in = INPUT_SIZE if l == 0 else H
        key, k1, k2, k3, k4 = jax.random.split(key, 5)
        w_ih = jax.random.uniform(k1, (d_in, 4 * H), jnp.float32, -bound, bound)
        w_hh = jax.random.uniform(k2, (H, 4 * H), jnp.float32, -bound, bound)
        b_ih = jax.random.uniform(k3, (1, 4 * H), jnp.float32, -bound, bound)
        b_hh = jax.random.uniform(k4, (1, 4 * H), jnp.float32, -bound, bound)
        w_ih_list.append(w_ih)
        w_hh_list.append(w_hh)
        b_list.append(b_ih + b_hh)          # combined bias, same math as PyTorch
    key, k5, k6 = jax.random.split(key, 3)
    fc_bound = 1.0 / jnp.sqrt(jnp.float32(H))
    w_fc = jax.random.uniform(k5, (H, 1), jnp.float32, -fc_bound, fc_bound)
    b_fc = jax.random.uniform(k6, (1, 1), jnp.float32, -fc_bound, fc_bound)
    return (w_ih_list, w_hh_list, b_list, w_fc, b_fc)


if __name__ == "__main__":
    key = jax.random.PRNGKey(0)
    key, xkey = jax.random.split(key)
    x = jax.random.normal(xkey, (BATCH, SEQ_LEN, INPUT_SIZE), jnp.float32)
    params = init_params(key)

    # One-time weight prep (gate permutation / stacking / bf16 cast) outside
    # the per-call forward path.
    prepped = jax.block_until_ready(prepare_params(params))

    y = lstm_model_forward_jit(x, prepped)
    y = jax.block_until_ready(y)

    y_ref = jax.block_until_ready(lstm_model_ref(x, params))

    assert y.shape == (BATCH, N_FUTURE, 1), y.shape
    assert jnp.allclose(y, y_ref, atol=2e-2, rtol=2e-2), (
        f"mismatch: max abs diff {jnp.max(jnp.abs(y - y_ref))}"
    )
    print("KERNEL_OK")
</pallas_src>

<mosaic_0001>
module attributes {stable_mosaic.version = 11 : i64} {
  func.func @kernel(%arg0: memref<2x8x8xf32, #tpu.memory_space<vmem>>, %arg1: memref<8x128xbf16, #tpu.memory_space<vmem>>, %arg2: memref<32x128xbf16, #tpu.memory_space<vmem>>, %arg3: memref<1x128xf32, #tpu.memory_space<vmem>>, %arg4: memref<64x128xbf16, #tpu.memory_space<vmem>>, %arg5: memref<1x128xf32, #tpu.memory_space<vmem>>, %arg6: memref<1x32xf32, #tpu.memory_space<vmem>>, %arg7: memref<1x1xf32, #tpu.memory_space<vmem>>, %arg8: memref<2x4xf32, #tpu.memory_space<vmem>>) attributes {dimension_semantics = [], scalar_prefetch = 0 : i64, scratch_operands = 0 : i64, tpu.core_type = #tpu.core_type<tc>} {
    %c0 = arith.constant 0 : index
    %c0_0 = arith.constant 0 : index
    %c0_1 = arith.constant 0 : index
    %0 = vector.load %arg0[%c0, %c0_0, %c0_1] : memref<2x8x8xf32, #tpu.memory_space<vmem>>, vector<2x8x8xf32>
    %1 = vector.shape_cast %0 : vector<2x8x8xf32> to vector<16x8xf32>
    %2 = arith.truncf %1 : vector<16x8xf32> to vector<16x8xbf16>
    %c0_2 = arith.constant 0 : index
    %c0_3 = arith.constant 0 : index
    %3 = vector.load %arg1[%c0_2, %c0_3] : memref<8x128xbf16, #tpu.memory_space<vmem>>, vector<8x128xbf16>
    %cst = arith.constant dense<0.000000e+00> : vector<16x128xf32>
    %4 = tpu.matmul %2, %3, %cst {dimension_numbers = #tpu.dot_dimension_numbers<[1], [0], [0], [1], [0, 0, 1, 1], [], []>} : vector<16x8xbf16>, vector<8x128xbf16>, vector<16x128xf32> -> vector<16x128xf32>
    %c0_4 = arith.constant 0 : index
    %c0_5 = arith.constant 0 : index
    %5 = vector.load %arg3[%c0_4, %c0_5] : memref<1x128xf32, #tpu.memory_space<vmem>>, vector<1x128xf32>
    %6 = vector.broadcast %5 : vector<1x128xf32> to vector<16x128xf32>
    %7 = arith.addf %4, %6 : vector<16x128xf32>
    %8 = vector.shape_cast %7 : vector<16x128xf32> to vector<2x8x128xf32>
    %c0_6 = arith.constant 0 : index
    %c0_7 = arith.constant 0 : index
    %9 = vector.load %arg2[%c0_6, %c0_7] : memref<32x128xbf16, #tpu.memory_space<vmem>>, vector<32x128xbf16>
    %c0_8 = arith.constant 0 : index
    %c0_9 = arith.constant 0 : index
    %10 = vector.load %arg4[%c0_8, %c0_9] : memref<64x128xbf16, #tpu.memory_space<vmem>>, vector<64x128xbf16>
    %c0_10 = arith.constant 0 : index
    %c0_11 = arith.constant 0 : index
    %11 = vector.load %arg5[%c0_10, %c0_11] : memref<1x128xf32, #tpu.memory_space<vmem>>, vector<1x128xf32>
    %c0_12 = arith.constant 0 : index
    %c0_13 = arith.constant 0 : index
    %12 = vector.load %arg6[%c0_12, %c0_13] : memref<1x32xf32, #tpu.memory_space<vmem>>, vector<1x32xf32>
    %cst_14 = arith.constant 0.000000e+00 : f32
    %13 = vector.broadcast %cst_14 : f32 to vector<2x32xf32>
    %14 = vector.extract_strided_slice %8 {offsets = [0, 0, 0], sizes = [2, 1, 128], strides = [1, 1, 1]} : vector<2x8x128xf32> to vector<2x1x128xf32>
    %15 = vector.shape_cast %14 : vector<2x1x128xf32> to vector<2x128xf32>
    %16 = vector.extract_strided_slice %15 {offsets = [0, 0], sizes = [2, 96], strides = [1, 1]} : vector<2x128xf32> to vector<2x96xf32>
    %17 = arith.negf %16 : vector<2x96xf32>
    %18 = math.exp %17 : vector<2x96xf32>
    %cst_15 = arith.constant 1.000000e+00 : f32
    %19 = vector.broadcast %cst_15 : f32 to vector<2x96xf32>
    %20 = arith.addf %19, %18 : vector<2x96xf32>
    %21 = arith.divf %19, %20 : vector<2x96xf32>
    %22 = vector.extract_strided_slice %15 {offsets = [0, 96], sizes = [2, 32], strides = [1, 1]} : vector<2x128xf32> to vector<2x32xf32>
    %23 = math.tanh %22 : vector<2x32xf32>
    %24 = vector.extract_strided_slice %21 {offsets = [0, 0], sizes = [2, 32], strides = [1, 1]} : vector<2x96xf32> to vector<2x32xf32>
    %25 = vector.extract_strided_slice %21 {offsets = [0, 32], sizes = [2, 32], strides = [1, 1]} : vector<2x96xf32> to vector<2x32xf32>
    %26 = vector.extract_strided_slice %21 {offsets = [0, 64], sizes = [2, 32], strides = [1, 1]} : vector<2x96xf32> to vector<2x32xf32>
    %27 = arith.mulf %25, %13 : vector<2x32xf32>
    %28 = arith.mulf %24, %23 : vector<2x32xf32>
    %29 = arith.addf %27, %28 : vector<2x32xf32>
    %30 = math.tanh %29 : vector<2x32xf32>
    %31 = arith.mulf %26, %30 : vector<2x32xf32>
    %32 = vector.extract_strided_slice %8 {offsets = [0, 1, 0], sizes = [2, 1, 128], strides = [1, 1, 1]} : vector<2x8x128xf32> to vector<2x1x128xf32>
    %33 = vector.shape_cast %32 : vector<2x1x128xf32> to vector<2x128xf32>
    %34 = arith.truncf %31 : vector<2x32xf32> to vector<2x32xbf16>
    %cst_16 = arith.constant dense<0.000000e+00> : vector<2x128xf32>
    %35 = tpu.matmul %34, %9, %cst_16 {dimension_numbers = #tpu.dot_dimension_numbers<[1], [0], [0], [1], [0, 0, 1, 1], [], []>} : vector<2x32xbf16>, vector<32x128xbf16>, vector<2x128xf32> -> vector<2x128xf32>
    %36 = arith.addf %33, %35 : vector<2x128xf32>
    %37 = vector.extract_strided_slice %36 {offsets = [0, 0], sizes = [2, 96], strides = [1, 1]} : vector<2x128xf32> to vector<2x96xf32>
    %38 = arith.negf %37 : vector<2x96xf32>
    %39 = math.exp %38 : vector<2x96xf32>
    %cst_17 = arith.constant 1.000000e+00 : f32
    %40 = vector.broadcast %cst_17 : f32 to vector<2x96xf32>
    %41 = arith.addf %40, %39 : vector<2x96xf32>
    %42 = arith.divf %40, %41 : vector<2x96xf32>
    %43 = vector.extract_strided_slice %36 {offsets = [0, 96], sizes = [2, 32], strides = [1, 1]} : vector<2x128xf32> to vector<2x32xf32>
    %44 = math.tanh %43 : vector<2x32xf32>
    %45 = vector.extract_strided_slice %42 {offsets = [0, 0], sizes = [2, 32], strides = [1, 1]} : vector<2x96xf32> to vector<2x32xf32>
    %46 = vector.extract_strided_slice %42 {offsets = [0, 32], sizes = [2, 32], strides = [1, 1]} : vector<2x96xf32> to vector<2x32xf32>
    %47 = vector.extract_strided_slice %42 {offsets = [0, 64], sizes = [2, 32], strides = [1, 1]} : vector<2x96xf32> to vector<2x32xf32>
    %48 = arith.mulf %46, %29 : vector<2x32xf32>
    %49 = arith.mulf %45, %44 : vector<2x32xf32>
    %50 = arith.addf %48, %49 : vector<2x32xf32>
    %51 = math.tanh %50 : vector<2x32xf32>
    %52 = arith.mulf %47, %51 : vector<2x32xf32>
    %53 = tpu.concatenate %31, %13 in 1 : vector<2x32xf32>, vector<2x32xf32> -> vector<2x64xf32>
    %54 = arith.truncf %53 : vector<2x64xf32> to vector<2x64xbf16>
    %cst_18 = arith.constant dense<0.000000e+00> : vector<2x128xf32>
    %55 = tpu.matmul %54, %10, %cst_18 {dimension_numbers = #tpu.dot_dimension_numbers<[1], [0], [0], [1], [0, 0, 1, 1], [], []>} : vector<2x64xbf16>, vector<64x128xbf16>, vector<2x128xf32> -> vector<2x128xf32>
    %56 = vector.broadcast %11 : vector<1x128xf32> to vector<2x128xf32>
    %57 = arith.addf %55, %56 : vector<2x128xf32>
    %58 = vector.extract_strided_slice %57 {offsets = [0, 0], sizes = [2, 96], strides = [1, 1]} : vector<2x128xf32> to vector<2x96xf32>
    %59 = arith.negf %58 : vector<2x96xf32>
    %60 = math.exp %59 : vector<2x96xf32>
    %cst_19 = arith.constant 1.000000e+00 : f32
    %61 = vector.broadcast %cst_19 : f32 to vector<2x96xf32>
    %62 = arith.addf %61, %60 : vector<2x96xf32>
    %63 = arith.divf %61, %62 : vector<2x96xf32>
    %64 = vector.extract_strided_slice %57 {offsets = [0, 96], sizes = [2, 32], strides = [1, 1]} : vector<2x128xf32> to vector<2x32xf32>
    %65 = math.tanh %64 : vector<2x32xf32>
    %66 = vector.extract_strided_slice %63 {offsets = [0, 0], sizes = [2, 32], strides = [1, 1]} : vector<2x96xf32> to vector<2x32xf32>
    %67 = vector.extract_strided_slice %63 {offsets = [0, 32], sizes = [2, 32], strides = [1, 1]} : vector<2x96xf32> to vector<2x32xf32>
    %68 = vector.extract_strided_slice %63 {offsets = [0, 64], sizes = [2, 32], strides = [1, 1]} : vector<2x96xf32> to vector<2x32xf32>
    %69 = arith.mulf %67, %13 : vector<2x32xf32>
    %70 = arith.mulf %66, %65 : vector<2x32xf32>
    %71 = arith.addf %69, %70 : vector<2x32xf32>
    %72 = math.tanh %71 : vector<2x32xf32>
    %73 = arith.mulf %68, %72 : vector<2x32xf32>
    %74 = vector.extract_strided_slice %8 {offsets = [0, 2, 0], sizes = [2, 1, 128], strides = [1, 1, 1]} : vector<2x8x128xf32> to vector<2x1x128xf32>
    %75 = vector.shape_cast %74 : vector<2x1x128xf32> to vector<2x128xf32>
    %76 = arith.truncf %52 : vector<2x32xf32> to vector<2x32xbf16>
    %cst_20 = arith.constant dense<0.000000e+00> : vector<2x128xf32>
    %77 = tpu.matmul %76, %9, %cst_20 {dimension_numbers = #tpu.dot_dimension_numbers<[1], [0], [0], [1], [0, 0, 1, 1], [], []>} : vector<2x32xbf16>, vector<32x128xbf16>, vector<2x128xf32> -> vector<2x128xf32>
    %78 = arith.addf %75, %77 : vector<2x128xf32>
    %79 = vector.extract_strided_slice %78 {offsets = [0, 0], sizes = [2, 96], strides = [1, 1]} : vector<2x128xf32> to vector<2x96xf32>
    %80 = arith.negf %79 : vector<2x96xf32>
    %81 = math.exp %80 : vector<2x96xf32>
    %cst_21 = arith.constant 1.000000e+00 : f32
    %82 = vector.broadcast %cst_21 : f32 to vector<2x96xf32>
    %83 = arith.addf %82, %81 : vector<2x96xf32>
    %84 = arith.divf %82, %83 : vector<2x96xf32>
    %85 = vector.extract_strided_slice %78 {offsets = [0, 96], sizes = [2, 32], strides = [1, 1]} : vector<2x128xf32> to vector<2x32xf32>
    %86 = math.tanh %85 : vector<2x32xf32>
    %87 = vector.extract_strided_slice %84 {offsets = [0, 0], sizes = [2, 32], strides = [1, 1]} : vector<2x96xf32> to vector<2x32xf32>
    %88 = vector.extract_strided_slice %84 {offsets = [0, 32], sizes = [2, 32], strides = [1, 1]} : vector<2x96xf32> to vector<2x32xf32>
    %89 = vector.extract_strided_slice %84 {offsets = [0, 64], sizes = [2, 32], strides = [1, 1]} : vector<2x96xf32> to vector<2x32xf32>
    %90 = arith.mulf %88, %50 : vector<2x32xf32>
    %91 = arith.mulf %87, %86 : vector<2x32xf32>
    %92 = arith.addf %90, %91 : vector<2x32xf32>
    %93 = math.tanh %92 : vector<2x32xf32>
    %94 = arith.mulf %89, %93 : vector<2x32xf32>
    %95 = tpu.concatenate %52, %73 in 1 : vector<2x32xf32>, vector<2x32xf32> -> vector<2x64xf32>
    %96 = arith.truncf %95 : vector<2x64xf32> to vector<2x64xbf16>
    %cst_22 = arith.constant dense<0.000000e+00> : vector<2x128xf32>
    %97 = tpu.matmul %96, %10, %cst_22 {dimension_numbers = #tpu.dot_dimension_numbers<[1], [0], [0], [1], [0, 0, 1, 1], [], []>} : vector<2x64xbf16>, vector<64x128xbf16>, vector<2x128xf32> -> vector<2x128xf32>
    %98 = vector.broadcast %11 : vector<1x128xf32> to vector<2x128xf32>
    %99 = arith.addf %97, %98 : vector<2x128xf32>
    %100 = vector.extract_strided_slice %99 {offsets = [0, 0], sizes = [2, 96], strides = [1, 1]} : vector<2x128xf32> to vector<2x96xf32>
    %101 = arith.negf %100 : vector<2x96xf32>
    %102 = math.exp %101 : vector<2x96xf32>
    %cst_23 = arith.constant 1.000000e+00 : f32
    %103 = vector.broadcast %cst_23 : f32 to vector<2x96xf32>
    %104 = arith.addf %103, %102 : vector<2x96xf32>
    %105 = arith.divf %103, %104 : vector<2x96xf32>
    %106 = vector.extract_strided_slice %99 {offsets = [0, 96], sizes = [2, 32], strides = [1, 1]} : vector<2x128xf32> to vector<2x32xf32>
    %107 = math.tanh %106 : vector<2x32xf32>
    %108 = vector.extract_strided_slice %105 {offsets = [0, 0], sizes = [2, 32], strides = [1, 1]} : vector<2x96xf32> to vector<2x32xf32>
    %109 = vector.extract_strided_slice %105 {offsets = [0, 32], sizes = [2, 32], strides = [1, 1]} : vector<2x96xf32> to vector<2x32xf32>
    %110 = vector.extract_strided_slice %105 {offsets = [0, 64], sizes = [2, 32], strides = [1, 1]} : vector<2x96xf32> to vector<2x32xf32>
    %111 = arith.mulf %109, %71 : vector<2x32xf32>
    %112 = arith.mulf %108, %107 : vector<2x32xf32>
    %113 = arith.addf %111, %112 : vector<2x32xf32>
    %114 = math.tanh %113 : vector<2x32xf32>
    %115 = arith.mulf %110, %114 : vector<2x32xf32>
    %116 = vector.extract_strided_slice %8 {offsets = [0, 3, 0], sizes = [2, 1, 128], strides = [1, 1, 1]} : vector<2x8x128xf32> to vector<2x1x128xf32>
    %117 = vector.shape_cast %116 : vector<2x1x128xf32> to vector<2x128xf32>
    %118 = arith.truncf %94 : vector<2x32xf32> to vector<2x32xbf16>
    %cst_24 = arith.constant dense<0.000000e+00> : vector<2x128xf32>
    %119 = tpu.matmul %118, %9, %cst_24 {dimension_numbers = #tpu.dot_dimension_numbers<[1], [0], [0], [1], [0, 0, 1, 1], [], []>} : vector<2x32xbf16>, vector<32x128xbf16>, vector<2x128xf32> -> vector<2x128xf32>
    %120 = arith.addf %117, %119 : vector<2x128xf32>
    %121 = vector.extract_strided_slice %120 {offsets = [0, 0], sizes = [2, 96], strides = [1, 1]} : vector<2x128xf32> to vector<2x96xf32>
    %122 = arith.negf %121 : vector<2x96xf32>
    %123 = math.exp %122 : vector<2x96xf32>
    %cst_25 = arith.constant 1.000000e+00 : f32
    %124 = vector.broadcast %cst_25 : f32 to vector<2x96xf32>
    %125 = arith.addf %124, %123 : vector<2x96xf32>
    %126 = arith.divf %124, %125 : vector<2x96xf32>
    %127 = vector.extract_strided_slice %120 {offsets = [0, 96], sizes = [2, 32], strides = [1, 1]} : vector<2x128xf32> to vector<2x32xf32>
    %128 = math.tanh %127 : vector<2x32xf32>
    %129 = vector.extract_strided_slice %126 {offsets = [0, 0], sizes = [2, 32], strides = [1, 1]} : vector<2x96xf32> to vector<2x32xf32>
    %130 = vector.extract_strided_slice %126 {offsets = [0, 32], sizes = [2, 32], strides = [1, 1]} : vector<2x96xf32> to vector<2x32xf32>
    %131 = vector.extract_strided_slice %126 {offsets = [0, 64], sizes = [2, 32], strides = [1, 1]} : vector<2x96xf32> to vector<2x32xf32>
    %132 = arith.mulf %130, %92 : vector<2x32xf32>
    %133 = arith.mulf %129, %128 : vector<2x32xf32>
    %134 = arith.addf %132, %133 : vector<2x32xf32>
    %135 = math.tanh %134 : vector<2x32xf32>
    %136 = arith.mulf %131, %135 : vector<2x32xf32>
    %137 = tpu.concatenate %94, %115 in 1 : vector<2x32xf32>, vector<2x32xf32> -> vector<2x64xf32>
    %138 = arith.truncf %137 : vector<2x64xf32> to vector<2x64xbf16>
    %cst_26 = arith.constant dense<0.000000e+00> : vector<2x128xf32>
    %139 = tpu.matmul %138, %10, %cst_26 {dimension_numbers = #tpu.dot_dimension_numbers<[1], [0], [0], [1], [0, 0, 1, 1], [], []>} : vector<2x64xbf16>, vector<64x128xbf16>, vector<2x128xf32> -> vector<2x128xf32>
    %140 = vector.broadcast %11 : vector<1x128xf32> to vector<2x128xf32>
    %141 = arith.addf %139, %140 : vector<2x128xf32>
    %142 = vector.extract_strided_slice %141 {offsets = [0, 0], sizes = [2, 96], strides = [1, 1]} : vector<2x128xf32> to vector<2x96xf32>
    %143 = arith.negf %142 : vector<2x96xf32>
    %144 = math.exp %143 : vector<2x96xf32>
    %cst_27 = arith.constant 1.000000e+00 : f32
    %145 = vector.broadcast %cst_27 : f32 to vector<2x96xf32>
    %146 = arith.addf %145, %144 : vector<2x96xf32>
    %147 = arith.divf %145, %146 : vector<2x96xf32>
    %148 = vector.extract_strided_slice %141 {offsets = [0, 96], sizes = [2, 32], strides = [1, 1]} : vector<2x128xf32> to vector<2x32xf32>
    %149 = math.tanh %148 : vector<2x32xf32>
    %150 = vector.extract_strided_slice %147 {offsets = [0, 0], sizes = [2, 32], strides = [1, 1]} : vector<2x96xf32> to vector<2x32xf32>
    %151 = vector.extract_strided_slice %147 {offsets = [0, 32], sizes = [2, 32], strides = [1, 1]} : vector<2x96xf32> to vector<2x32xf32>
    %152 = vector.extract_strided_slice %147 {offsets = [0, 64], sizes = [2, 32], strides = [1, 1]} : vector<2x96xf32> to vector<2x32xf32>
    %153 = arith.mulf %151, %113 : vector<2x32xf32>
    %154 = arith.mulf %150, %149 : vector<2x32xf32>
    %155 = arith.addf %153, %154 : vector<2x32xf32>
    %156 = math.tanh %155 : vector<2x32xf32>
    %157 = arith.mulf %152, %156 : vector<2x32xf32>
    %158 = vector.extract_strided_slice %8 {offsets = [0, 4, 0], sizes = [2, 1, 128], strides = [1, 1, 1]} : vector<2x8x128xf32> to vector<2x1x128xf32>
    %159 = vector.shape_cast %158 : vector<2x1x128xf32> to vector<2x128xf32>
    %160 = arith.truncf %136 : vector<2x32xf32> to vector<2x32xbf16>
    %cst_28 = arith.constant dense<0.000000e+00> : vector<2x128xf32>
    %161 = tpu.matmul %160, %9, %cst_28 {dimension_numbers = #tpu.dot_dimension_numbers<[1], [0], [0], [1], [0, 0, 1, 1], [], []>} : vector<2x32xbf16>, vector<32x128xbf16>, vector<2x128xf32> -> vector<2x128xf32>
    %162 = arith.addf %159, %161 : vector<2x128xf32>
    %163 = vector.extract_strided_slice %162 {offsets = [0, 0], sizes = [2, 96], strides = [1, 1]} : vector<2x128xf32> to vector<2x96xf32>
    %164 = arith.negf %163 : vector<2x96xf32>
    %165 = math.exp %164 : vector<2x96xf32>
    %cst_29 = arith.constant 1.000000e+00 : f32
    %166 = vector.broadcast %cst_29 : f32 to vector<2x96xf32>
    %167 = arith.addf %166, %165 : vector<2x96xf32>
    %168 = arith.divf %166, %167 : vector<2x96xf32>
    %169 = vector.extract_strided_slice %162 {offsets = [0, 96], sizes = [2, 32], strides = [1, 1]} : vector<2x128xf32> to vector<2x32xf32>
    %170 = math.tanh %169 : vector<2x32xf32>
    %171 = vector.extract_strided_slice %168 {offsets = [0, 0], sizes = [2, 32], strides = [1, 1]} : vector<2x96xf32> to vector<2x32xf32>
    %172 = vector.extract_strided_slice %168 {offsets = [0, 32], sizes = [2, 32], strides = [1, 1]} : vector<2x96xf32> to vector<2x32xf32>
    %173 = vector.extract_strided_slice %168 {offsets = [0, 64], sizes = [2, 32], strides = [1, 1]} : vector<2x96xf32> to vector<2x32xf32>
    %174 = arith.mulf %172, %134 : vector<2x32xf32>
    %175 = arith.mulf %171, %170 : vector<2x32xf32>
    %176 = arith.addf %174, %175 : vector<2x32xf32>
    %177 = math.tanh %176 : vector<2x32xf32>
    %178 = arith.mulf %173, %177 : vector<2x32xf32>
    %179 = tpu.concatenate %136, %157 in 1 : vector<2x32xf32>, vector<2x32xf32> -> vector<2x64xf32>
    %180 = arith.truncf %179 : vector<2x64xf32> to vector<2x64xbf16>
    %cst_30 = arith.constant dense<0.000000e+00> : vector<2x128xf32>
    %181 = tpu.matmul %180, %10, %cst_30 {dimension_numbers = #tpu.dot_dimension_numbers<[1], [0], [0], [1], [0, 0, 1, 1], [], []>} : vector<2x64xbf16>, vector<64x128xbf16>, vector<2x128xf32> -> vector<2x128xf32>
    %182 = vector.broadcast %11 : vector<1x128xf32> to vector<2x128xf32>
    %183 = arith.addf %181, %182 : vector<2x128xf32>
    %184 = vector.extract_strided_slice %183 {offsets = [0, 0], sizes = [2, 96], strides = [1, 1]} : vector<2x128xf32> to vector<2x96xf32>
    %185 = arith.negf %184 : vector<2x96xf32>
    %186 = math.exp %185 : vector<2x96xf32>
    %cst_31 = arith.constant 1.000000e+00 : f32
    %187 = vector.broadcast %cst_31 : f32 to vector<2x96xf32>
    %188 = arith.addf %187, %186 : vector<2x96xf32>
    %189 = arith.divf %187, %188 : vector<2x96xf32>
    %190 = vector.extract_strided_slice %183 {offsets = [0, 96], sizes = [2, 32], strides = [1, 1]} : vector<2x128xf32> to vector<2x32xf32>
    %191 = math.tanh %190 : vector<2x32xf32>
    %192 = vector.extract_strided_slice %189 {offsets = [0, 0], sizes = [2, 32], strides = [1, 1]} : vector<2x96xf32> to vector<2x32xf32>
    %193 = vector.extract_strided_slice %189 {offsets = [0, 32], sizes = [2, 32], strides = [1, 1]} : vector<2x96xf32> to vector<2x32xf32>
    %194 = vector.extract_strided_slice %189 {offsets = [0, 64], sizes = [2, 32], strides = [1, 1]} : vector<2x96xf32> to vector<2x32xf32>
    %195 = arith.mulf %193, %155 : vector<2x32xf32>
    %196 = arith.mulf %192, %191 : vector<2x32xf32>
    %197 = arith.addf %195, %196 : vector<2x32xf32>
    %198 = math.tanh %197 : vector<2x32xf32>
    %199 = arith.mulf %194, %198 : vector<2x32xf32>
    %200 = vector.extract_strided_slice %8 {offsets = [0, 5, 0], sizes = [2, 1, 128], strides = [1, 1, 1]} : vector<2x8x128xf32> to vector<2x1x128xf32>
    %201 = vector.shape_cast %200 : vector<2x1x128xf32> to vector<2x128xf32>
    %202 = arith.truncf %178 : vector<2x32xf32> to vector<2x32xbf16>
    %cst_32 = arith.constant dense<0.000000e+00> : vector<2x128xf32>
    %203 = tpu.matmul %202, %9, %cst_32 {dimension_numbers = #tpu.dot_dimension_numbers<[1], [0], [0], [1], [0, 0, 1, 1], [], []>} : vector<2x32xbf16>, vector<32x128xbf16>, vector<2x128xf32> -> vector<2x128xf32>
    %204 = arith.addf %201, %203 : vector<2x128xf32>
    %205 = vector.extract_strided_slice %204 {offsets = [0, 0], sizes = [2, 96], strides = [1, 1]} : vector<2x128xf32> to vector<2x96xf32>
    %206 = arith.negf %205 : vector<2x96xf32>
    %207 = math.exp %206 : vector<2x96xf32>
    %cst_33 = arith.constant 1.000000e+00 : f32
    %208 = vector.broadcast %cst_33 : f32 to vector<2x96xf32>
    %209 = arith.addf %208, %207 : vector<2x96xf32>
    %210 = arith.divf %208, %209 : vector<2x96xf32>
    %211 = vector.extract_strided_slice %204 {offsets = [0, 96], sizes = [2, 32], strides = [1, 1]} : vector<2x128xf32> to vector<2x32xf32>
    %212 = math.tanh %211 : vector<2x32xf32>
    %213 = vector.extract_strided_slice %210 {offsets = [0, 0], sizes = [2, 32], strides = [1, 1]} : vector<2x96xf32> to vector<2x32xf32>
    %214 = vector.extract_strided_slice %210 {offsets = [0, 32], sizes = [2, 32], strides = [1, 1]} : vector<2x96xf32> to vector<2x32xf32>
    %215 = vector.extract_strided_slice %210 {offsets = [0, 64], sizes = [2, 32], strides = [1, 1]} : vector<2x96xf32> to vector<2x32xf32>
    %216 = arith.mulf %214, %176 : vector<2x32xf32>
    %217 = arith.mulf %213, %212 : vector<2x32xf32>
    %218 = arith.addf %216, %217 : vector<2x32xf32>
    %219 = math.tanh %218 : vector<2x32xf32>
    %220 = arith.mulf %215, %219 : vector<2x32xf32>
    %221 = tpu.concatenate %178, %199 in 1 : vector<2x32xf32>, vector<2x32xf32> -> vector<2x64xf32>
    %222 = arith.truncf %221 : vector<2x64xf32> to vector<2x64xbf16>
    %cst_34 = arith.constant dense<0.000000e+00> : vector<2x128xf32>
    %223 = tpu.matmul %222, %10, %cst_34 {dimension_numbers = #tpu.dot_dimension_numbers<[1], [0], [0], [1], [0, 0, 1, 1], [], []>} : vector<2x64xbf16>, vector<64x128xbf16>, vector<2x128xf32> -> vector<2x128xf32>
    %224 = vector.broadcast %11 : vector<1x128xf32> to vector<2x128xf32>
    %225 = arith.addf %223, %224 : vector<2x128xf32>
    %226 = vector.extract_strided_slice %225 {offsets = [0, 0], sizes = [2, 96], strides = [1, 1]} : vector<2x128xf32> to vector<2x96xf32>
    %227 = arith.negf %226 : vector<2x96xf32>
    %228 = math.exp %227 : vector<2x96xf32>
    %cst_35 = arith.constant 1.000000e+00 : f32
    %229 = vector.broadcast %cst_35 : f32 to vector<2x96xf32>
    %230 = arith.addf %229, %228 : vector<2x96xf32>
    %231 = arith.divf %229, %230 : vector<2x96xf32>
    %232 = vector.extract_strided_slice %225 {offsets = [0, 96], sizes = [2, 32], strides = [1, 1]} : vector<2x128xf32> to vector<2x32xf32>
    %233 = math.tanh %232 : vector<2x32xf32>
    %234 = vector.extract_strided_slice %231 {offsets = [0, 0], sizes = [2, 32], strides = [1, 1]} : vector<2x96xf32> to vector<2x32xf32>
    %235 = vector.extract_strided_slice %231 {offsets = [0, 32], sizes = [2, 32], strides = [1, 1]} : vector<2x96xf32> to vector<2x32xf32>
    %236 = vector.extract_strided_slice %231 {offsets = [0, 64], sizes = [2, 32], strides = [1, 1]} : vector<2x96xf32> to vector<2x32xf32>
    %237 = arith.mulf %235, %197 : vector<2x32xf32>
    %238 = arith.mulf %234, %233 : vector<2x32xf32>
    %239 = arith.addf %237, %238 : vector<2x32xf32>
    %240 = math.tanh %239 : vector<2x32xf32>
    %241 = arith.mulf %236, %240 : vector<2x32xf32>
    %242 = vector.broadcast %12 : vector<1x32xf32> to vector<2x32xf32>
    %243 = arith.mulf %241, %242 : vector<2x32xf32>
    %cst_36 = arith.constant dense<0.000000e+00> : vector<2xf32>
    %244 = vector.multi_reduction <add>, %243, %cst_36 [1] : vector<2x32xf32> to vector<2xf32>
    %245 = vector.shape_cast %244 : vector<2xf32> to vector<2x1xf32>
    %246 = vector.extract_strided_slice %8 {offsets = [0, 6, 0], sizes = [2, 1, 128], strides = [1, 1, 1]} : vector<2x8x128xf32> to vector<2x1x128xf32>
    %247 = vector.shape_cast %246 : vector<2x1x128xf32> to vector<2x128xf32>
    %248 = arith.truncf %220 : vector<2x32xf32> to vector<2x32xbf16>
    %cst_37 = arith.constant dense<0.000000e+00> : vector<2x128xf32>
    %249 = tpu.matmul %248, %9, %cst_37 {dimension_numbers = #tpu.dot_dimension_numbers<[1], [0], [0], [1], [0, 0, 1, 1], [], []>} : vector<2x32xbf16>, vector<32x128xbf16>, vector<2x128xf32> -> vector<2x128xf32>
    %250 = arith.addf %247, %249 : vector<2x128xf32>
    %251 = vector.extract_strided_slice %250 {offsets = [0, 0], sizes = [2, 96], strides = [1, 1]} : vector<2x128xf32> to vector<2x96xf32>
    %252 = arith.negf %251 : vector<2x96xf32>
    %253 = math.exp %252 : vector<2x96xf32>
    %cst_38 = arith.constant 1.000000e+00 : f32
    %254 = vector.broadcast %cst_38 : f32 to vector<2x96xf32>
    %255 = arith.addf %254, %253 : vector<2x96xf32>
    %256 = arith.divf %254, %255 : vector<2x96xf32>
    %257 = vector.extract_strided_slice %250 {offsets = [0, 96], sizes = [2, 32], strides = [1, 1]} : vector<2x128xf32> to vector<2x32xf32>
    %258 = math.tanh %257 : vector<2x32xf32>
    %259 = vector.extract_strided_slice %256 {offsets = [0, 0], sizes = [2, 32], strides = [1, 1]} : vector<2x96xf32> to vector<2x32xf32>
    %260 = vector.extract_strided_slice %256 {offsets = [0, 32], sizes = [2, 32], strides = [1, 1]} : vector<2x96xf32> to vector<2x32xf32>
    %261 = vector.extract_strided_slice %256 {offsets = [0, 64], sizes = [2, 32], strides = [1, 1]} : vector<2x96xf32> to vector<2x32xf32>
    %262 = arith.mulf %260, %218 : vector<2x32xf32>
    %263 = arith.mulf %259, %258 : vector<2x32xf32>
    %264 = arith.addf %262, %263 : vector<2x32xf32>
    %265 = math.tanh %264 : vector<2x32xf32>
    %266 = arith.mulf %261, %265 : vector<2x32xf32>
    %267 = tpu.concatenate %220, %241 in 1 : vector<2x32xf32>, vector<2x32xf32> -> vector<2x64xf32>
    %268 = arith.truncf %267 : vector<2x64xf32> to vector<2x64xbf16>
    %cst_39 = arith.constant dense<0.000000e+00> : vector<2x128xf32>
    %269 = tpu.matmul %268, %10, %cst_39 {dimension_numbers = #tpu.dot_dimension_numbers<[1], [0], [0], [1], [0, 0, 1, 1], [], []>} : vector<2x64xbf16>, vector<64x128xbf16>, vector<2x128xf32> -> vector<2x128xf32>
    %270 = vector.broadcast %11 : vector<1x128xf32> to vector<2x128xf32>
    %271 = arith.addf %269, %270 : vector<2x128xf32>
    %272 = vector.extract_strided_slice %271 {offsets = [0, 0], sizes = [2, 96], strides = [1, 1]} : vector<2x128xf32> to vector<2x96xf32>
    %273 = arith.negf %272 : vector<2x96xf32>
    %274 = math.exp %273 : vector<2x96xf32>
    %cst_40 = arith.constant 1.000000e+00 : f32
    %275 = vector.broadcast %cst_40 : f32 to vector<2x96xf32>
    %276 = arith.addf %275, %274 : vector<2x96xf32>
    %277 = arith.divf %275, %276 : vector<2x96xf32>
    %278 = vector.extract_strided_slice %271 {offsets = [0, 96], sizes = [2, 32], strides = [1, 1]} : vector<2x128xf32> to vector<2x32xf32>
    %279 = math.tanh %278 : vector<2x32xf32>
    %280 = vector.extract_strided_slice %277 {offsets = [0, 0], sizes = [2, 32], strides = [1, 1]} : vector<2x96xf32> to vector<2x32xf32>
    %281 = vector.extract_strided_slice %277 {offsets = [0, 32], sizes = [2, 32], strides = [1, 1]} : vector<2x96xf32> to vector<2x32xf32>
    %282 = vector.extract_strided_slice %277 {offsets = [0, 64], sizes = [2, 32], strides = [1, 1]} : vector<2x96xf32> to vector<2x32xf32>
    %283 = arith.mulf %281, %239 : vector<2x32xf32>
    %284 = arith.mulf %280, %279 : vector<2x32xf32>
    %285 = arith.addf %283, %284 : vector<2x32xf32>
    %286 = math.tanh %285 : vector<2x32xf32>
    %287 = arith.mulf %282, %286 : vector<2x32xf32>
    %288 = vector.broadcast %12 : vector<1x32xf32> to vector<2x32xf32>
    %289 = arith.mulf %287, %288 : vector<2x32xf32>
    %cst_41 = arith.constant dense<0.000000e+00> : vector<2xf32>
    %290 = vector.multi_reduction <add>, %289, %cst_41 [1] : vector<2x32xf32> to vector<2xf32>
    %291 = vector.shape_cast %290 : vector<2xf32> to vector<2x1xf32>
    %292 = vector.extract_strided_slice %8 {offsets = [0, 7, 0], sizes = [2, 1, 128], strides = [1, 1, 1]} : vector<2x8x128xf32> to vector<2x1x128xf32>
    %293 = vector.shape_cast %292 : vector<2x1x128xf32> to vector<2x128xf32>
    %294 = arith.truncf %266 : vector<2x32xf32> to vector<2x32xbf16>
    %cst_42 = arith.constant dense<0.000000e+00> : vector<2x128xf32>
    %295 = tpu.matmul %294, %9, %cst_42 {dimension_numbers = #tpu.dot_dimension_numbers<[1], [0], [0], [1], [0, 0, 1, 1], [], []>} : vector<2x32xbf16>, vector<32x128xbf16>, vector<2x128xf32> -> vector<2x128xf32>
    %296 = arith.addf %293, %295 : vector<2x128xf32>
    %297 = vector.extract_strided_slice %296 {offsets = [0, 0], sizes = [2, 96], strides = [1, 1]} : vector<2x128xf32> to vector<2x96xf32>
    %298 = arith.negf %297 : vector<2x96xf32>
    %299 = math.exp %298 : vector<2x96xf32>
    %cst_43 = arith.constant 1.000000e+00 : f32
    %300 = vector.broadcast %cst_43 : f32 to vector<2x96xf32>
    %301 = arith.addf %300, %299 : vector<2x96xf32>
    %302 = arith.divf %300, %301 : vector<2x96xf32>
    %303 = vector.extract_strided_slice %296 {offsets = [0, 96], sizes = [2, 32], strides = [1, 1]} : vector<2x128xf32> to vector<2x32xf32>
    %304 = math.tanh %303 : vector<2x32xf32>
    %305 = vector.extract_strided_slice %302 {offsets = [0, 0], sizes = [2, 32], strides = [1, 1]} : vector<2x96xf32> to vector<2x32xf32>
    %306 = vector.extract_strided_slice %302 {offsets = [0, 32], sizes = [2, 32], strides = [1, 1]} : vector<2x96xf32> to vector<2x32xf32>
    %307 = vector.extract_strided_slice %302 {offsets = [0, 64], sizes = [2, 32], strides = [1, 1]} : vector<2x96xf32> to vector<2x32xf32>
    %308 = arith.mulf %306, %264 : vector<2x32xf32>
    %309 = arith.mulf %305, %304 : vector<2x32xf32>
    %310 = arith.addf %308, %309 : vector<2x32xf32>
    %311 = math.tanh %310 : vector<2x32xf32>
    %312 = arith.mulf %307, %311 : vector<2x32xf32>
    %313 = tpu.concatenate %266, %287 in 1 : vector<2x32xf32>, vector<2x32xf32> -> vector<2x64xf32>
    %314 = arith.truncf %313 : vector<2x64xf32> to vector<2x64xbf16>
    %cst_44 = arith.constant dense<0.000000e+00> : vector<2x128xf32>
    %315 = tpu.matmul %314, %10, %cst_44 {dimension_numbers = #tpu.dot_dimension_numbers<[1], [0], [0], [1], [0, 0, 1, 1], [], []>} : vector<2x64xbf16>, vector<64x128xbf16>, vector<2x128xf32> -> vector<2x128xf32>
    %316 = vector.broadcast %11 : vector<1x128xf32> to vector<2x128xf32>
    %317 = arith.addf %315, %316 : vector<2x128xf32>
    %318 = vector.extract_strided_slice %317 {offsets = [0, 0], sizes = [2, 96], strides = [1, 1]} : vector<2x128xf32> to vector<2x96xf32>
    %319 = arith.negf %318 : vector<2x96xf32>
    %320 = math.exp %319 : vector<2x96xf32>
    %cst_45 = arith.constant 1.000000e+00 : f32
    %321 = vector.broadcast %cst_45 : f32 to vector<2x96xf32>
    %322 = arith.addf %321, %320 : vector<2x96xf32>
    %323 = arith.divf %321, %322 : vector<2x96xf32>
    %324 = vector.extract_strided_slice %317 {offsets = [0, 96], sizes = [2, 32], strides = [1, 1]} : vector<2x128xf32> to vector<2x32xf32>
    %325 = math.tanh %324 : vector<2x32xf32>
    %326 = vector.extract_strided_slice %323 {offsets = [0, 0], sizes = [2, 32], strides = [1, 1]} : vector<2x96xf32> to vector<2x32xf32>
    %327 = vector.extract_strided_slice %323 {offsets = [0, 32], sizes = [2, 32], strides = [1, 1]} : vector<2x96xf32> to vector<2x32xf32>
    %328 = vector.extract_strided_slice %323 {offsets = [0, 64], sizes = [2, 32], strides = [1, 1]} : vector<2x96xf32> to vector<2x32xf32>
    %329 = arith.mulf %327, %285 : vector<2x32xf32>
    %330 = arith.mulf %326, %325 : vector<2x32xf32>
    %331 = arith.addf %329, %330 : vector<2x32xf32>
    %332 = math.tanh %331 : vector<2x32xf32>
    %333 = arith.mulf %328, %332 : vector<2x32xf32>
    %334 = vector.broadcast %12 : vector<1x32xf32> to vector<2x32xf32>
    %335 = arith.mulf %333, %334 : vector<2x32xf32>
    %cst_46 = arith.constant dense<0.000000e+00> : vector<2xf32>
    %336 = vector.multi_reduction <add>, %335, %cst_46 [1] : vector<2x32xf32> to vector<2xf32>
    %337 = vector.shape_cast %336 : vector<2xf32> to vector<2x1xf32>
    %338 = tpu.concatenate %312, %333 in 1 : vector<2x32xf32>, vector<2x32xf32> -> vector<2x64xf32>
    %339 = arith.truncf %338 : vector<2x64xf32> to vector<2x64xbf16>
    %cst_47 = arith.constant dense<0.000000e+00> : vector<2x128xf32>
    %340 = tpu.matmul %339, %10, %cst_47 {dimension_numbers = #tpu.dot_dimension_numbers<[1], [0], [0], [1], [0, 0, 1, 1], [], []>} : vector<2x64xbf16>, vector<64x128xbf16>, vector<2x128xf32> -> vector<2x128xf32>
    %341 = vector.broadcast %11 : vector<1x128xf32> to vector<2x128xf32>
    %342 = arith.addf %340, %341 : vector<2x128xf32>
    %343 = vector.extract_strided_slice %342 {offsets = [0, 0], sizes = [2, 96], strides = [1, 1]} : vector<2x128xf32> to vector<2x96xf32>
    %344 = arith.negf %343 : vector<2x96xf32>
    %345 = math.exp %344 : vector<2x96xf32>
    %cst_48 = arith.constant 1.000000e+00 : f32
    %346 = vector.broadcast %cst_48 : f32 to vector<2x96xf32>
    %347 = arith.addf %346, %345 : vector<2x96xf32>
    %348 = arith.divf %346, %347 : vector<2x96xf32>
    %349 = vector.extract_strided_slice %342 {offsets = [0, 96], sizes = [2, 32], strides = [1, 1]} : vector<2x128xf32> to vector<2x32xf32>
    %350 = math.tanh %349 : vector<2x32xf32>
    %351 = vector.extract_strided_slice %348 {offsets = [0, 0], sizes = [2, 32], strides = [1, 1]} : vector<2x96xf32> to vector<2x32xf32>
    %352 = vector.extract_strided_slice %348 {offsets = [0, 32], sizes = [2, 32], strides = [1, 1]} : vector<2x96xf32> to vector<2x32xf32>
    %353 = vector.extract_strided_slice %348 {offsets = [0, 64], sizes = [2, 32], strides = [1, 1]} : vector<2x96xf32> to vector<2x32xf32>
    %354 = arith.mulf %352, %331 : vector<2x32xf32>
    %355 = arith.mulf %351, %350 : vector<2x32xf32>
    %356 = arith.addf %354, %355 : vector<2x32xf32>
    %357 = math.tanh %356 : vector<2x32xf32>
    %358 = arith.mulf %353, %357 : vector<2x32xf32>
    %359 = vector.broadcast %12 : vector<1x32xf32> to vector<2x32xf32>
    %360 = arith.mulf %358, %359 : vector<2x32xf32>
    %cst_49 = arith.constant dense<0.000000e+00> : vector<2xf32>
    %361 = vector.multi_reduction <add>, %360, %cst_49 [1] : vector<2x32xf32> to vector<2xf32>
    %362 = vector.shape_cast %361 : vector<2xf32> to vector<2x1xf32>
    %363 = tpu.concatenate %245, %291, %337, %362 in 1 : vector<2x1xf32>, vector<2x1xf32>, vector<2x1xf32>, vector<2x1xf32> -> vector<2x4xf32>
    %c0_50 = arith.constant 0 : index
    %c0_51 = arith.constant 0 : index
    %364 = vector.load %arg7[%c0_50, %c0_51] : memref<1x1xf32, #tpu.memory_space<vmem>>, vector<1x1xf32>
    %365 = vector.broadcast %364 : vector<1x1xf32> to vector<2x4xf32>
    %366 = arith.addf %363, %365 : vector<2x4xf32>
    %c0_52 = arith.constant 0 : index
    %c0_53 = arith.constant 0 : index
    %367 = vector.load %arg8[%c0_52, %c0_53] : memref<2x4xf32, #tpu.memory_space<vmem>>, vector<2x4xf32>
    tpu.vector_store %arg8[%c0_52, %c0_53], %366 {strides = array<i32>} : memref<2x4xf32, #tpu.memory_space<vmem>>, vector<2x4xf32>,
    return
  }
}

</mosaic_0001>

<llo_original>
// kernel: lstm_model_forward.1
$region0: #{lstm_model_forward.1}
  #allocation0 [shape = 'u32[]', space=smem, size = 0x4, offset = 0x4, fixed_abs, tag = 'smem constant byte address 0x4 - core index']
  #allocation1 [shape = 'u32[144,128]{1,0:T(1,128)}', space=vmem, size = 0x12000, scoped, tag = 'internal scratch']
  #allocation2 [shape = 'f32[1,1]{1,0:T(1,128)S(1)}', space=vmem, size = 0x200, scoped, tag = 'scoped memory for lstm_model_forward.1']
  %s0 = inlined_call_operand.hbm [shape: f32[2,8,8], index: 0, kind: input, shape index: {}]
  %s1 = inlined_call_operand.vmem [shape: bf16[8,128], index: 1, kind: input, shape index: {}]
  %s2 = inlined_call_operand.hbm [shape: bf16[32,128], index: 2, kind: input, shape index: {}]
  %s3 = inlined_call_operand.vmem [shape: f32[1,128], index: 3, kind: input, shape index: {}]
  %s4 = inlined_call_operand.hbm [shape: bf16[64,128], index: 4, kind: input, shape index: {}]
  %s5 = inlined_call_operand.vmem [shape: f32[1,128], index: 5, kind: input, shape index: {}]
  %s6 = inlined_call_operand.vmem [shape: f32[1,32], index: 6, kind: input, shape index: {}]
  %s7 = inlined_call_operand.<no memory space> [shape: f32[1,1], index: 7, kind: input, shape index: {}]
  %s8 = inlined_call_operand.hbm [shape: f32[2,4], index: 8, kind: output, shape index: {}]
  %s9 = sld [smem:[#allocation0]]
  $region54: #{lstm_model_forward.1} parent=0
    _
  %s11 = ssub.s32 1, %s9
  %s12 = scalar_select 0, %s11, %s9
  %v13 = vstv %s7
  %14 = vst [vmem:[#allocation2] sm:$0x1] %v13
  $region1: #{lstm_model_forward.1} parent=0
    #allocation3 [shape = 'u8[8192]{0}', space=vmem, size = 0x2000, scoped, tag = 'input window, operand 0, single buffered']
    #allocation4 [shape = 's32[1]{0}', space=sflag, size = 0x4, scoped, tag = 'scoped memory for lstm_model_forward.1']
    #allocation5 [shape = 's32[1]{0}', space=sflag, size = 0x4, scoped, tag = 'scoped memory for lstm_model_forward.1']
    #allocation6 [shape = 'u8[8192]{0}', space=vmem, size = 0x2000, scoped, tag = 'input window, operand 2, single buffered']
    #allocation7 [shape = 's32[1]{0}', space=sflag, size = 0x4, scoped, tag = 'scoped memory for lstm_model_forward.1']
    #allocation8 [shape = 'u8[16384]{0}', space=vmem, size = 0x4000, scoped, tag = 'input window, operand 4, single buffered']
    #allocation9 [shape = 'u8[1024]{0}', space=vmem, size = 0x400, scoped, tag = 'output window, operand 0, single buffered']
    %15 = vsyncpa [#allocation4], 0
    %16 = vsyncpa [#allocation7], 0
    %17 = vsyncpa [#allocation5], 0
    // Predicated region
    $region2: #{lstm_model_forward.1} parent=1 // pred_check
      _
    $region3: #{lstm_model_forward.1} parent=1 // pred_check_branch
      %19 = sbr.rel (0) target = $region5
    $region4: #{lstm_model_forward.1} parent=1 // pred_region
      %s21 = ssub.s32 256, 256
      %22 = vsyncadd [#allocation4], %s21
      %s23 = sshll.u32 [#allocation3], 4
      %s24 = int_to_ptr.vmem [resolvable:$true] %s23
      %29 = dma.hbm_to_vmem [thread:$0]  %s0, 256, %s24, [#allocation4], 128, 128, 8
    $region5: #{lstm_model_forward.1} parent=1 // pred_fallthru
      _
    // Predicated region
    $region6: #{lstm_model_forward.1} parent=1 // pred_check
      _
    $region7: #{lstm_model_forward.1} parent=1 // pred_check_branch
      %31 = sbr.rel (0) target = $region9
    $region8: #{lstm_model_forward.1} parent=1 // pred_region
      _
    $region9: #{lstm_model_forward.1} parent=1 // pred_fallthru
      _
    // Predicated region
    $region10: #{lstm_model_forward.1} parent=1 // pred_check
      _
    $region11: #{lstm_model_forward.1} parent=1 // pred_check_branch
      %33 = sbr.rel (0) target = $region13
    $region12: #{lstm_model_forward.1} parent=1 // pred_region
      %s35 = ssub.s32 256, 256
      %36 = vsyncadd [#allocation7], %s35
      %s37 = sshll.u32 [#allocation6], 4
      %s38 = int_to_ptr.vmem [resolvable:$true] %s37
      %43 = dma.hbm_to_vmem [thread:$0]  %s2, 256, %s38, [#allocation7], 64, 64, 4
    $region13: #{lstm_model_forward.1} parent=1 // pred_fallthru
      _
    // Predicated region
    $region14: #{lstm_model_forward.1} parent=1 // pred_check
      _
    $region15: #{lstm_model_forward.1} parent=1 // pred_check_branch
      %45 = sbr.rel (0) target = $region17
    $region16: #{lstm_model_forward.1} parent=1 // pred_region
      _
    $region17: #{lstm_model_forward.1} parent=1 // pred_fallthru
      _
    // Predicated region
    $region18: #{lstm_model_forward.1} parent=1 // pred_check
      _
    $region19: #{lstm_model_forward.1} parent=1 // pred_check_branch
      %47 = sbr.rel (0) target = $region21
    $region20: #{lstm_model_forward.1} parent=1 // pred_region
      %s49 = ssub.s32 512, 512
      %50 = vsyncadd [#allocation7], %s49
      %s51 = sshll.u32 [#allocation8], 4
      %s52 = int_to_ptr.vmem [resolvable:$true] %s51
      %57 = dma.hbm_to_vmem [thread:$0]  %s4, 512, %s52, [#allocation7], 64, 64, 4
    $region21: #{lstm_model_forward.1} parent=1 // pred_fallthru
      _
    // Predicated region
    $region22: #{lstm_model_forward.1} parent=1 // pred_check
      _
    $region23: #{lstm_model_forward.1} parent=1 // pred_check_branch
      %59 = sbr.rel (0) target = $region25
    $region24: #{lstm_model_forward.1} parent=1 // pred_region
      _
    $region25: #{lstm_model_forward.1} parent=1 // pred_fallthru
      _
    // Predicated region
    $region26: #{lstm_model_forward.1} parent=1 // pred_check
      _
    $region27: #{lstm_model_forward.1} parent=1 // pred_check_branch
      %61 = sbr.rel (0) target = $region29
    $region28: #{lstm_model_forward.1} parent=1 // pred_region
      _
    $region29: #{lstm_model_forward.1} parent=1 // pred_fallthru
      _
    // Predicated region
    $region30: #{lstm_model_forward.1} parent=1 // pred_check
      _
    $region31: #{lstm_model_forward.1} parent=1 // pred_check_branch
      %63 = sbr.rel (0) target = $region33
    $region32: #{lstm_model_forward.1} parent=1 // pred_region
      _
    $region33: #{lstm_model_forward.1} parent=1 // pred_fallthru
      _
    // Predicated region
    $region34: #{lstm_model_forward.1} parent=1 // pred_check
      _
    $region35: #{lstm_model_forward.1} parent=1 // pred_check_branch
      %65 = sbr.rel (0) target = $region37
    $region36: #{lstm_model_forward.1} parent=1 // pred_region
      %66 = dma.done [#allocation4], 256
    $region37: #{lstm_model_forward.1} parent=1 // pred_fallthru
      _
    // Predicated region
    $region38: #{lstm_model_forward.1} parent=1 // pred_check
      _
    $region39: #{lstm_model_forward.1} parent=1 // pred_check_branch
      %68 = sbr.rel (0) target = $region41
    $region40: #{lstm_model_forward.1} parent=1 // pred_region
      %69 = dma.done [#allocation7], 256
    $region41: #{lstm_model_forward.1} parent=1 // pred_fallthru
      _
    // Predicated region
    $region42: #{lstm_model_forward.1} parent=1 // pred_check
      _
    $region43: #{lstm_model_forward.1} parent=1 // pred_check_branch
      %71 = sbr.rel (0) target = $region45
    $region44: #{lstm_model_forward.1} parent=1 // pred_region
      %72 = dma.done [#allocation7], 512
    $region45: #{lstm_model_forward.1} parent=1 // pred_fallthru
      _
    %v74 = vld [vmem:[#allocation3] sm:$0xff]
    %v75 = vld [vmem:[#allocation3 + $0x8] sm:$0xff]
    %v76 = vpack.c.bf16 %v75, %v74
    %v77 = vld [vmem:[%s1] sm:$0xf]
    %v78 = vld [vmem:[%s3] sm:$0x1]
    %v80 = vlaneseq
    %v81 = vshrl.u32 %v80, 7
    %v82 = vsub.s32 0, %v81
    %v83 = vrot.slane %v78, %v82
    %vm85 = vcmask 64512
    %v87 = vsel %vm85, %v76, 0
    %vm89 = vcmask 1043456
    %v91 = vsel %vm89, %v77, 0
    %93 = vmatprep.subr.bf16.mxu0 0
    %94 = vmatpush1.bf16.msra.mxu0 %v91
    %95 = vmatprep.subr.bf16.mxu0 0
    %96 = vmatpush1.bf16.msra.mxu0 0
    %97 = vmatprep.subr.bf16.mxu0 0
    %98 = vmatpush1.bf16.msra.mxu0 0
    %99 = vmatprep.subr.bf16.mxu0 0
    %100 = vmatpush1.bf16.msra.mxu0 0
    %101 = vmatprep.subr.bf16.mxu0 0
    %102 = vmatpush1.bf16.msra.mxu0 0
    %103 = vmatprep.subr.bf16.mxu0 0
    %104 = vmatpush1.bf16.msra.mxu0 0
    %105 = vmatprep.subr.bf16.mxu0 0
    %106 = vmatpush1.bf16.msra.mxu0 0
    %107 = vmatprep.subr.bf16.mxu0 0
    %108 = vmatpush1.bf16.msra.mxu0 0
    %109 = vmatprep.subr.bf16.mxu0 0
    %110 = vmatpush1.bf16.msra.mxu0 0
    %111 = vmatprep.subr.bf16.mxu0 0
    %112 = vmatpush1.bf16.msra.mxu0 0
    %113 = vmatprep.subr.bf16.mxu0 0
    %114 = vmatpush1.bf16.msra.mxu0 0
    %115 = vmatprep.subr.bf16.mxu0 0
    %116 = vmatpush1.bf16.msra.mxu0 0
    %117 = vmatprep.subr.bf16.mxu0 0
    %118 = vmatpush1.bf16.msra.mxu0 0
    %119 = vmatprep.subr.bf16.mxu0 0
    %120 = vmatpush1.bf16.msra.mxu0 0
    %121 = vmatprep.subr.bf16.mxu0 0
    %122 = vmatpush1.bf16.msra.mxu0 0
    %123 = vmatprep.subr.bf16.mxu0 0
    %124 = vmatpush1.bf16.msra.mxu0 0
    %125 = vmatprep.mubr.bf16.mxu0 0
    %126 = vmatmul.mubr.bf16.gmra.mrb[0].mxu0 %v87
    %v127 = vpop.f32.mrb[0].mxu0
    %v128 = vadd.f32 %v83, %v127
    %v129 = vpop.f32.mrb[0].mxu0
    %v130 = vpop.f32.mrb[0].mxu0
    %v131 = vadd.f32 %v83, %v130
    %v132 = vpop.f32.mrb[0].mxu0
    %133 = vdwg.mxu0
    %v134 = vld [vmem:[#allocation6] sm:$0xf]
    %v135 = vld [vmem:[#allocation6 + $0x4] sm:$0xf]
    %v136 = vld [vmem:[#allocation6 + $0x8] sm:$0xf]
    %v137 = vld [vmem:[#allocation6 + $0xc] sm:$0xf]
    %v138 = vld [vmem:[#allocation8] sm:$0xf]
    %v139 = vld [vmem:[#allocation8 + $0x4] sm:$0xf]
    %v140 = vld [vmem:[#allocation8 + $0x8] sm:$0xf]
    %v141 = vld [vmem:[#allocation8 + $0xc] sm:$0xf]
    %v142 = vld [vmem:[#allocation8 + $0x10] sm:$0xf]
    %v143 = vld [vmem:[#allocation8 + $0x14] sm:$0xf]
    %v144 = vld [vmem:[#allocation8 + $0x18] sm:$0xf]
    %v145 = vld [vmem:[#allocation8 + $0x1c] sm:$0xf]
    %v146 = vld [vmem:[%s5] sm:$0x1]
    %v147 = vld [vmem:[%s6] sm:$0x1]
    %v148 = vxor.u32 %v128, 2147483648
    %v149 = vxor.u32 %v131, 2147483648
    %v150 = vmul.f32 %v148, 1.442695
    %v151 = vpow.pop %v150
    %v152 = vmul.f32 %v149, 1.442695
    %v153 = vpow.pop %v152
    %v154 = vadd.f32 %v151, 1.0
    %v155 = vadd.f32 %v153, 1.0
    %v156 = vrcp.pop %v154
    %v157 = vmul.f32 1.0, %v156
    %v158 = vrcp.pop %v155
    %v159 = vmul.f32 1.0, %v158
    %v160 = vtanh.pop %v128
    %v161 = vtanh.pop %v131
    %v162 = vmul.f32 %v157, 0.0
    %v163 = vmul.f32 %v159, 0.0
    %166 = vrot.lane.b32.xlu0 %v160, 32
    %v167 = vpop.permute.xlu0 %166
    %168 = vrot.lane.b32.xlu0 %v161, 32
    %v169 = vpop.permute.xlu0 %168
    %v172 = vmul.f32 %v157, %v167
    %v173 = vmul.f32 %v159, %v169
    %176 = vrot.lane.b32.xlu0 %v172, 32
    %v177 = vpop.permute.xlu0 %176
    %178 = vrot.lane.b32.xlu0 %v173, 32
    %v179 = vpop.permute.xlu0 %178
    %v182 = vadd.f32 %v162, %v177
    %v183 = vadd.f32 %v163, %v179
    %v184 = vtanh.pop %v182
    %v185 = vtanh.pop %v183
    %188 = vrot.lane.b32.xlu0 %v184, 32
    %v189 = vpop.permute.xlu0 %188
    %190 = vrot.lane.b32.xlu0 %v185, 32
    %v191 = vpop.permute.xlu0 %190
    %v194 = vmul.f32 %v157, %v189
    %v195 = vmul.f32 %v159, %v191
    %v196 = vpack.c.bf16 %v194, %v194
    %v197 = vpack.c.bf16 %v195, %v195
    %v200 = vunpack.c.l.b16 %v196
    %v201 = vunpack.c.l.b16 %v197
    %v202 = vrot.slane %v201, 7
    %vm203 = vcmask 1041409
    %v204 = vsel %vm203, %v202, %v200
    %v205 = vpack.c.b16 %v204, %v204
    %206 = vrot.lane.b32.xlu0 %v205, 64
    %v207 = vpop.permute.xlu0 %206
    %v212 = vunpack.c.l.b16 %v134
    %v213 = vunpack.c.l.b16 %v135
    %v214 = vunpack.c.l.b16 %v136
    %v215 = vunpack.c.l.b16 %v137
    %v216 = vpack.c.b16 %v213, %v212
    %v217 = vpack.c.b16 %v215, %v214
    %vm220 = vcmask 261120
    %v222 = vsel %vm220, %v207, 0
    %224 = vmatprep.subr.bf16.mxu0 0
    %225 = vmatpush1.bf16.msra.mxu0 %v216
    %226 = vmatprep.subr.bf16.mxu0 0
    %227 = vmatpush1.bf16.msra.mxu0 %v217
    %228 = vmatprep.subr.bf16.mxu0 0
    %229 = vmatpush1.bf16.msra.mxu0 0
    %230 = vmatprep.subr.bf16.mxu0 0
    %231 = vmatpush1.bf16.msra.mxu0 0
    %232 = vmatprep.subr.bf16.mxu0 0
    %233 = vmatpush1.bf16.msra.mxu0 0
    %234 = vmatprep.subr.bf16.mxu0 0
    %235 = vmatpush1.bf16.msra.mxu0 0
    %236 = vmatprep.subr.bf16.mxu0 0
    %237 = vmatpush1.bf16.msra.mxu0 0
    %238 = vmatprep.subr.bf16.mxu0 0
    %239 = vmatpush1.bf16.msra.mxu0 0
    %240 = vmatprep.subr.bf16.mxu0 0
    %241 = vmatpush1.bf16.msra.mxu0 0
    %242 = vmatprep.subr.bf16.mxu0 0
    %243 = vmatpush1.bf16.msra.mxu0 0
    %244 = vmatprep.subr.bf16.mxu0 0
    %245 = vmatpush1.bf16.msra.mxu0 0
    %246 = vmatprep.subr.bf16.mxu0 0
    %247 = vmatpush1.bf16.msra.mxu0 0
    %248 = vmatprep.subr.bf16.mxu0 0
    %249 = vmatpush1.bf16.msra.mxu0 0
    %250 = vmatprep.subr.bf16.mxu0 0
    %251 = vmatpush1.bf16.msra.mxu0 0
    %252 = vmatprep.subr.bf16.mxu0 0
    %253 = vmatpush1.bf16.msra.mxu0 0
    %254 = vmatprep.subr.bf16.mxu0 0
    %255 = vmatpush1.bf16.msra.mxu0 0
    %256 = vmatprep.mubr.bf16.mxu0 0
    %257 = vmatmul.mubr.bf16.gmra.mrb[0].mxu0 %v222
    %v258 = vpop.f32.mrb[0].mxu0
    %v259 = vadd.f32 0.0, %v258
    %v260 = vpop.f32.mrb[0].mxu0
    %v261 = vpop.f32.mrb[0].mxu0
    %v262 = vpop.f32.mrb[0].mxu0
    %263 = vdwg.mxu0
    %v265 = vrot.slane %v259, 7
    %v268 = vadd.f32 %v128, %v265
    %v269 = vadd.f32 %v131, %v259
    %v270 = vxor.u32 %v268, 2147483648
    %v271 = vxor.u32 %v269, 2147483648
    %v272 = vmul.f32 %v270, 1.442695
    %v273 = vpow.pop %v272
    %v274 = vmul.f32 %v271, 1.442695
    %v275 = vpow.pop %v274
    %v276 = vadd.f32 %v273, 1.0
    %v277 = vadd.f32 %v275, 1.0
    %v278 = vrcp.pop %v276
    %v279 = vmul.f32 1.0, %v278
    %v280 = vrcp.pop %v277
    %v281 = vmul.f32 1.0, %v280
    %v282 = vtanh.pop %v268
    %v283 = vtanh.pop %v269
    %v286 = vrot.slane %v182, 7
    %v287 = vrot.slane %v183, 7
    %v290 = vmul.f32 %v279, %v286
    %v291 = vmul.f32 %v281, %v287
    %294 = vrot.lane.b32.xlu0 %v282, 32
    %v295 = vpop.permute.xlu0 %294
    %296 = vrot.lane.b32.xlu0 %v283, 32
    %v297 = vpop.permute.xlu0 %296
    %v300 = vmul.f32 %v279, %v295
    %v301 = vmul.f32 %v281, %v297
    %304 = vrot.lane.b32.xlu0 %v300, 32
    %v305 = vpop.permute.xlu0 %304
    %306 = vrot.lane.b32.xlu0 %v301, 32
    %v307 = vpop.permute.xlu0 %306
    %v310 = vadd.f32 %v290, %v305
    %v311 = vadd.f32 %v291, %v307
    %v312 = vtanh.pop %v310
    %v313 = vtanh.pop %v311
    %316 = vrot.lane.b32.xlu0 %v312, 32
    %v317 = vpop.permute.xlu0 %316
    %318 = vrot.lane.b32.xlu0 %v313, 32
    %v319 = vpop.permute.xlu0 %318
    %v322 = vmul.f32 %v279, %v317
    %v323 = vmul.f32 %v281, %v319
    %v326 = vrot.slane %v195, 7
    %v327 = vsel %vm203, %v326, %v194
    %328 = vrot.lane.b32.xlu0 %v327, 64
    %v329 = vpop.permute.xlu0 %328
    %v331 = vsel %vm220, %v329, 0.0
    %v332 = vpack.c.bf16 %v331, %v331
    %v334 = vlaneseq
    %v335 = vshrl.u32 %v334, 7
    %v336 = vsub.s32 0, %v335
    %v337 = vrot.slane %v146, %v336
    %v347 = vunpack.c.l.b16 %v138
    %v348 = vunpack.c.l.b16 %v139
    %v349 = vunpack.c.l.b16 %v140
    %v350 = vunpack.c.l.b16 %v141
    %v351 = vunpack.c.l.b16 %v142
    %v352 = vunpack.c.l.b16 %v143
    %v353 = vunpack.c.l.b16 %v144
    %v354 = vunpack.c.l.b16 %v145
    %v355 = vpack.c.b16 %v348, %v347
    %v356 = vpack.c.b16 %v350, %v349
    %v357 = vpack.c.b16 %v352, %v351
    %v358 = vpack.c.b16 %v354, %v353
    %vm363 = vcmask 523264
    %v365 = vsel %vm363, %v332, 0
    %367 = vmatprep.subr.bf16.mxu0 0
    %368 = vmatpush1.bf16.msra.mxu0 %v355
    %369 = vmatprep.subr.bf16.mxu0 0
    %370 = vmatpush1.bf16.msra.mxu0 %v356
    %371 = vmatprep.subr.bf16.mxu0 0
    %372 = vmatpush1.bf16.msra.mxu0 %v357
    %373 = vmatprep.subr.bf16.mxu0 0
    %374 = vmatpush1.bf16.msra.mxu0 %v358
    %375 = vmatprep.subr.bf16.mxu0 0
    %376 = vmatpush1.bf16.msra.mxu0 0
    %377 = vmatprep.subr.bf16.mxu0 0
    %378 = vmatpush1.bf16.msra.mxu0 0
    %379 = vmatprep.subr.bf16.mxu0 0
    %380 = vmatpush1.bf16.msra.mxu0 0
    %381 = vmatprep.subr.bf16.mxu0 0
    %382 = vmatpush1.bf16.msra.mxu0 0
    %383 = vmatprep.subr.bf16.mxu0 0
    %384 = vmatpush1.bf16.msra.mxu0 0
    %385 = vmatprep.subr.bf16.mxu0 0
    %386 = vmatpush1.bf16.msra.mxu0 0
    %387 = vmatprep.subr.bf16.mxu0 0
    %388 = vmatpush1.bf16.msra.mxu0 0
    %389 = vmatprep.subr.bf16.mxu0 0
    %390 = vmatpush1.bf16.msra.mxu0 0
    %391 = vmatprep.subr.bf16.mxu0 0
    %392 = vmatpush1.bf16.msra.mxu0 0
    %393 = vmatprep.subr.bf16.mxu0 0
    %394 = vmatpush1.bf16.msra.mxu0 0
    %395 = vmatprep.subr.bf16.mxu0 0
    %396 = vmatpush1.bf16.msra.mxu0 0
    %397 = vmatprep.subr.bf16.mxu0 0
    %398 = vmatpush1.bf16.msra.mxu0 0
    %399 = vmatprep.mubr.bf16.mxu0 0
    %400 = vmatmul.mubr.bf16.gmra.mrb[0].mxu0 %v365
    %v401 = vpop.f32.mrb[0].mxu0
    %v402 = vadd.f32 %v337, %v401
    %v403 = vpop.f32.mrb[0].mxu0
    %v404 = vpop.f32.mrb[0].mxu0
    %v405 = vpop.f32.mrb[0].mxu0
    %406 = vdwg.mxu0
    %v407 = vxor.u32 %v402, 2147483648
    %v408 = vmul.f32 %v407, 1.442695
    %v409 = vpow.pop %v408
    %v410 = vadd.f32 %v409, 1.0
    %v411 = vrcp.pop %v410
    %v412 = vmul.f32 1.0, %v411
    %v413 = vtanh.pop %v402
    %v414 = vmul.f32 %v412, 0.0
    %416 = vrot.lane.b32.xlu0 %v413, 32
    %v417 = vpop.permute.xlu0 %416
    %v419 = vmul.f32 %v412, %v417
    %421 = vrot.lane.b32.xlu0 %v419, 32
    %v422 = vpop.permute.xlu0 %421
    %v424 = vadd.f32 %v414, %v422
    %v425 = vtanh.pop %v424
    %427 = vrot.lane.b32.xlu0 %v425, 32
    %v428 = vpop.permute.xlu0 %427
    %v430 = vmul.f32 %v412, %v428
    %v431 = vpack.c.bf16 %v322, %v322
    %v432 = vpack.c.bf16 %v323, %v323
    %v435 = vunpack.c.l.b16 %v431
    %v436 = vunpack.c.l.b16 %v432
    %v437 = vrot.slane %v435, 1
    %v438 = vsel %vm203, %v436, %v437
    %v439 = vpack.c.b16 %v438, %v438
    %440 = vrot.lane.b32.xlu0 %v439, 64
    %v441 = vpop.permute.xlu0 %440
    %v443 = vsel %vm220, %v441, 0
    %445 = vmatprep.subr.bf16.mxu0 0
    %446 = vmatpush1.bf16.msra.mxu0 %v216
    %447 = vmatprep.subr.bf16.mxu0 0
    %448 = vmatpush1.bf16.msra.mxu0 %v217
    %449 = vmatprep.subr.bf16.mxu0 0
    %450 = vmatpush1.bf16.msra.mxu0 0
    %451 = vmatprep.subr.bf16.mxu0 0
    %452 = vmatpush1.bf16.msra.mxu0 0
    %453 = vmatprep.subr.bf16.mxu0 0
    %454 = vmatpush1.bf16.msra.mxu0 0
    %455 = vmatprep.subr.bf16.mxu0 0
    %456 = vmatpush1.bf16.msra.mxu0 0
    %457 = vmatprep.subr.bf16.mxu0 0
    %458 = vmatpush1.bf16.msra.mxu0 0
    %459 = vmatprep.subr.bf16.mxu0 0
    %460 = vmatpush1.bf16.msra.mxu0 0
    %461 = vmatprep.subr.bf16.mxu0 0
    %462 = vmatpush1.bf16.msra.mxu0 0
    %463 = vmatprep.subr.bf16.mxu0 0
    %464 = vmatpush1.bf16.msra.mxu0 0
    %465 = vmatprep.subr.bf16.mxu0 0
    %466 = vmatpush1.bf16.msra.mxu0 0
    %467 = vmatprep.subr.bf16.mxu0 0
    %468 = vmatpush1.bf16.msra.mxu0 0
    %469 = vmatprep.subr.bf16.mxu0 0
    %470 = vmatpush1.bf16.msra.mxu0 0
    %471 = vmatprep.subr.bf16.mxu0 0
    %472 = vmatpush1.bf16.msra.mxu0 0
    %473 = vmatprep.subr.bf16.mxu0 0
    %474 = vmatpush1.bf16.msra.mxu0 0
    %475 = vmatprep.subr.bf16.mxu0 0
    %476 = vmatpush1.bf16.msra.mxu0 0
    %477 = vmatprep.mubr.bf16.mxu0 0
    %478 = vmatmul.mubr.bf16.gmra.mrb[0].mxu0 %v443
    %v479 = vpop.f32.mrb[0].mxu0
    %v480 = vadd.f32 0.0, %v479
    %v481 = vpop.f32.mrb[0].mxu0
    %v482 = vpop.f32.mrb[0].mxu0
    %v483 = vpop.f32.mrb[0].mxu0
    %484 = vdwg.mxu0
    %v486 = vrot.slane %v480, 6
    %v487 = vrot.slane %v480, 7
    %v490 = vadd.f32 %v128, %v486
    %v491 = vadd.f32 %v131, %v487
    %v492 = vxor.u32 %v490, 2147483648
    %v493 = vxor.u32 %v491, 2147483648
    %v494 = vmul.f32 %v492, 1.442695
    %v495 = vpow.pop %v494
    %v496 = vmul.f32 %v493, 1.442695
    %v497 = vpow.pop %v496
    %v498 = vadd.f32 %v495, 1.0
    %v499 = vadd.f32 %v497, 1.0
    %v500 = vrcp.pop %v498
    %v501 = vmul.f32 1.0, %v500
    %v502 = vrcp.pop %v499
    %v503 = vmul.f32 1.0, %v502
    %v504 = vtanh.pop %v490
    %v505 = vtanh.pop %v491
    %v508 = vrot.slane %v310, 7
    %v509 = vrot.slane %v311, 7
    %v512 = vmul.f32 %v501, %v508
    %v513 = vmul.f32 %v503, %v509
    %516 = vrot.lane.b32.xlu0 %v504, 32
    %v517 = vpop.permute.xlu0 %516
    %518 = vrot.lane.b32.xlu0 %v505, 32
    %v519 = vpop.permute.xlu0 %518
    %v522 = vmul.f32 %v501, %v517
    %v523 = vmul.f32 %v503, %v519
    %526 = vrot.lane.b32.xlu0 %v522, 32
    %v527 = vpop.permute.xlu0 %526
    %528 = vrot.lane.b32.xlu0 %v523, 32
    %v529 = vpop.permute.xlu0 %528
    %v532 = vadd.f32 %v512, %v527
    %v533 = vadd.f32 %v513, %v529
    %v534 = vtanh.pop %v532
    %v535 = vtanh.pop %v533
    %538 = vrot.lane.b32.xlu0 %v534, 32
    %v539 = vpop.permute.xlu0 %538
    %540 = vrot.lane.b32.xlu0 %v535, 32
    %v541 = vpop.permute.xlu0 %540
    %v544 = vmul.f32 %v501, %v539
    %v545 = vmul.f32 %v503, %v541
    %v548 = vrot.slane %v323, 7
    %vm549 = vcmask 1042434
    %v550 = vsel %vm549, %v548, %v322
    %551 = vrot.lane.b32.xlu0 %v550, 64
    %v552 = vpop.permute.xlu0 %551
    %v555 = vrot.slane %v430, 7
    %556 = vrot.lane.b32.xlu0 %v555, 96
    %v557 = vpop.permute.xlu0 %556
    %v559 = vsel %vm220, %v552, %v557
    %v560 = vpack.c.bf16 %v559, %v559
    %v562 = vshrl.u32 %v560, 16
    %v564 = vshll.u32 %v560, 16
    %v566 = vrot.slane %v564, 1
    %v567 = vor.u32 %v562, %v566
    %v569 = vsel %vm363, %v567, 0
    %571 = vmatprep.subr.bf16.mxu0 0
    %572 = vmatpush1.bf16.msra.mxu0 %v355
    %573 = vmatprep.subr.bf16.mxu0 0
    %574 = vmatpush1.bf16.msra.mxu0 %v356
    %575 = vmatprep.subr.bf16.mxu0 0
    %576 = vmatpush1.bf16.msra.mxu0 %v357
    %577 = vmatprep.subr.bf16.mxu0 0
    %578 = vmatpush1.bf16.msra.mxu0 %v358
    %579 = vmatprep.subr.bf16.mxu0 0
    %580 = vmatpush1.bf16.msra.mxu0 0
    %581 = vmatprep.subr.bf16.mxu0 0
    %582 = vmatpush1.bf16.msra.mxu0 0
    %583 = vmatprep.subr.bf16.mxu0 0
    %584 = vmatpush1.bf16.msra.mxu0 0
    %585 = vmatprep.subr.bf16.mxu0 0
    %586 = vmatpush1.bf16.msra.mxu0 0
    %587 = vmatprep.subr.bf16.mxu0 0
    %588 = vmatpush1.bf16.msra.mxu0 0
    %589 = vmatprep.subr.bf16.mxu0 0
    %590 = vmatpush1.bf16.msra.mxu0 0
    %591 = vmatprep.subr.bf16.mxu0 0
    %592 = vmatpush1.bf16.msra.mxu0 0
    %593 = vmatprep.subr.bf16.mxu0 0
    %594 = vmatpush1.bf16.msra.mxu0 0
    %595 = vmatprep.subr.bf16.mxu0 0
    %596 = vmatpush1.bf16.msra.mxu0 0
    %597 = vmatprep.subr.bf16.mxu0 0
    %598 = vmatpush1.bf16.msra.mxu0 0
    %599 = vmatprep.subr.bf16.mxu0 0
    %600 = vmatpush1.bf16.msra.mxu0 0
    %601 = vmatprep.subr.bf16.mxu0 0
    %602 = vmatpush1.bf16.msra.mxu0 0
    %603 = vmatprep.mubr.bf16.mxu0 0
    %604 = vmatmul.mubr.bf16.gmra.mrb[0].mxu0 %v569
    %v605 = vpop.f32.mrb[0].mxu0
    %v606 = vadd.f32 %v337, %v605
    %v607 = vpop.f32.mrb[0].mxu0
    %v608 = vpop.f32.mrb[0].mxu0
    %v609 = vpop.f32.mrb[0].mxu0
    %610 = vdwg.mxu0
    %v611 = vxor.u32 %v606, 2147483648
    %v612 = vmul.f32 %v611, 1.442695
    %v613 = vpow.pop %v612
    %v614 = vadd.f32 %v613, 1.0
    %v615 = vrcp.pop %v614
    %v616 = vmul.f32 1.0, %v615
    %v617 = vtanh.pop %v606
    %v618 = vmul.f32 %v616, %v424
    %620 = vrot.lane.b32.xlu0 %v617, 32
    %v621 = vpop.permute.xlu0 %620
    %v623 = vmul.f32 %v616, %v621
    %625 = vrot.lane.b32.xlu0 %v623, 32
    %v626 = vpop.permute.xlu0 %625
    %v628 = vadd.f32 %v618, %v626
    %v629 = vtanh.pop %v628
    %631 = vrot.lane.b32.xlu0 %v629, 32
    %v632 = vpop.permute.xlu0 %631
    %v634 = vmul.f32 %v616, %v632
    %v635 = vpack.c.bf16 %v544, %v544
    %v636 = vpack.c.bf16 %v545, %v545
    %v639 = vunpack.c.l.b16 %v635
    %v640 = vunpack.c.l.b16 %v636
    %v641 = vrot.slane %v639, 2
    %v642 = vrot.slane %v640, 1
    %v643 = vsel %vm203, %v642, %v641
    %v644 = vpack.c.b16 %v643, %v643
    %645 = vrot.lane.b32.xlu0 %v644, 64
    %v646 = vpop.permute.xlu0 %645
    %v648 = vsel %vm220, %v646, 0
    %650 = vmatprep.subr.bf16.mxu0 0
    %651 = vmatpush1.bf16.msra.mxu0 %v216
    %652 = vmatprep.subr.bf16.mxu0 0
    %653 = vmatpush1.bf16.msra.mxu0 %v217
    %654 = vmatprep.subr.bf16.mxu0 0
    %655 = vmatpush1.bf16.msra.mxu0 0
    %656 = vmatprep.subr.bf16.mxu0 0
    %657 = vmatpush1.bf16.msra.mxu0 0
    %658 = vmatprep.subr.bf16.mxu0 0
    %659 = vmatpush1.bf16.msra.mxu0 0
    %660 = vmatprep.subr.bf16.mxu0 0
    %661 = vmatpush1.bf16.msra.mxu0 0
    %662 = vmatprep.subr.bf16.mxu0 0
    %663 = vmatpush1.bf16.msra.mxu0 0
    %664 = vmatprep.subr.bf16.mxu0 0
    %665 = vmatpush1.bf16.msra.mxu0 0
    %666 = vmatprep.subr.bf16.mxu0 0
    %667 = vmatpush1.bf16.msra.mxu0 0
    %668 = vmatprep.subr.bf16.mxu0 0
    %669 = vmatpush1.bf16.msra.mxu0 0
    %670 = vmatprep.subr.bf16.mxu0 0
    %671 = vmatpush1.bf16.msra.mxu0 0
    %672 = vmatprep.subr.bf16.mxu0 0
    %673 = vmatpush1.bf16.msra.mxu0 0
    %674 = vmatprep.subr.bf16.mxu0 0
    %675 = vmatpush1.bf16.msra.mxu0 0
    %676 = vmatprep.subr.bf16.mxu0 0
    %677 = vmatpush1.bf16.msra.mxu0 0
    %678 = vmatprep.subr.bf16.mxu0 0
    %679 = vmatpush1.bf16.msra.mxu0 0
    %680 = vmatprep.subr.bf16.mxu0 0
    %681 = vmatpush1.bf16.msra.mxu0 0
    %682 = vmatprep.mubr.bf16.mxu0 0
    %683 = vmatmul.mubr.bf16.gmra.mrb[0].mxu0 %v648
    %v684 = vpop.f32.mrb[0].mxu0
    %v685 = vadd.f32 0.0, %v684
    %v686 = vpop.f32.mrb[0].mxu0
    %v687 = vpop.f32.mrb[0].mxu0
    %v688 = vpop.f32.mrb[0].mxu0
    %689 = vdwg.mxu0
    %v691 = vrot.slane %v685, 5
    %v692 = vrot.slane %v685, 6
    %v695 = vadd.f32 %v128, %v691
    %v696 = vadd.f32 %v131, %v692
    %v697 = vxor.u32 %v695, 2147483648
    %v698 = vxor.u32 %v696, 2147483648
    %v699 = vmul.f32 %v697, 1.442695
    %v700 = vpow.pop %v699
    %v701 = vmul.f32 %v698, 1.442695
    %v702 = vpow.pop %v701
    %v703 = vadd.f32 %v700, 1.0
    %v704 = vadd.f32 %v702, 1.0
    %v705 = vrcp.pop %v703
    %v706 = vmul.f32 1.0, %v705
    %v707 = vrcp.pop %v704
    %v708 = vmul.f32 1.0, %v707
    %v709 = vtanh.pop %v695
    %v710 = vtanh.pop %v696
    %v713 = vrot.slane %v532, 7
    %v714 = vrot.slane %v533, 7
    %v717 = vmul.f32 %v706, %v713
    %v718 = vmul.f32 %v708, %v714
    %721 = vrot.lane.b32.xlu0 %v709, 32
    %v722 = vpop.permute.xlu0 %721
    %723 = vrot.lane.b32.xlu0 %v710, 32
    %v724 = vpop.permute.xlu0 %723
    %v727 = vmul.f32 %v706, %v722
    %v728 = vmul.f32 %v708, %v724
    %731 = vrot.lane.b32.xlu0 %v727, 32
    %v732 = vpop.permute.xlu0 %731
    %733 = vrot.lane.b32.xlu0 %v728, 32
    %v734 = vpop.permute.xlu0 %733
    %v737 = vadd.f32 %v717, %v732
    %v738 = vadd.f32 %v718, %v734
    %v739 = vtanh.pop %v737
    %v740 = vtanh.pop %v738
    %743 = vrot.lane.b32.xlu0 %v739, 32
    %v744 = vpop.permute.xlu0 %743
    %745 = vrot.lane.b32.xlu0 %v740, 32
    %v746 = vpop.permute.xlu0 %745
    %v749 = vmul.f32 %v706, %v744
    %v750 = vmul.f32 %v708, %v746
    %v753 = vrot.slane %v545, 7
    %vm754 = vcmask 1043459
    %v755 = vsel %vm754, %v753, %v544
    %756 = vrot.lane.b32.xlu0 %v755, 64
    %v757 = vpop.permute.xlu0 %756
    %v760 = vrot.slane %v634, 6
    %761 = vrot.lane.b32.xlu0 %v760, 96
    %v762 = vpop.permute.xlu0 %761
    %v764 = vsel %vm220, %v757, %v762
    %v765 = vpack.c.bf16 %v764, %v764
    %v767 = vrot.slane %v765, 1
    %v769 = vsel %vm363, %v767, 0
    %771 = vmatprep.subr.bf16.mxu0 0
    %772 = vmatpush1.bf16.msra.mxu0 %v355
    %773 = vmatprep.subr.bf16.mxu0 0
    %774 = vmatpush1.bf16.msra.mxu0 %v356
    %775 = vmatprep.subr.bf16.mxu0 0
    %776 = vmatpush1.bf16.msra.mxu0 %v357
    %777 = vmatprep.subr.bf16.mxu0 0
    %778 = vmatpush1.bf16.msra.mxu0 %v358
    %779 = vmatprep.subr.bf16.mxu0 0
    %780 = vmatpush1.bf16.msra.mxu0 0
    %781 = vmatprep.subr.bf16.mxu0 0
    %782 = vmatpush1.bf16.msra.mxu0 0
    %783 = vmatprep.subr.bf16.mxu0 0
    %784 = vmatpush1.bf16.msra.mxu0 0
    %785 = vmatprep.subr.bf16.mxu0 0
    %786 = vmatpush1.bf16.msra.mxu0 0
    %787 = vmatprep.subr.bf16.mxu0 0
    %788 = vmatpush1.bf16.msra.mxu0 0
    %789 = vmatprep.subr.bf16.mxu0 0
    %790 = vmatpush1.bf16.msra.mxu0 0
    %791 = vmatprep.subr.bf16.mxu0 0
    %792 = vmatpush1.bf16.msra.mxu0 0
    %793 = vmatprep.subr.bf16.mxu0 0
    %794 = vmatpush1.bf16.msra.mxu0 0
    %795 = vmatprep.subr.bf16.mxu0 0
    %796 = vmatpush1.bf16.msra.mxu0 0
    %797 = vmatprep.subr.bf16.mxu0 0
    %798 = vmatpush1.bf16.msra.mxu0 0
    %799 = vmatprep.subr.bf16.mxu0 0
    %800 = vmatpush1.bf16.msra.mxu0 0
    %801 = vmatprep.subr.bf16.mxu0 0
    %802 = vmatpush1.bf16.msra.mxu0 0
    %803 = vmatprep.mubr.bf16.mxu0 0
    %804 = vmatmul.mubr.bf16.gmra.mrb[0].mxu0 %v769
    %v805 = vpop.f32.mrb[0].mxu0
    %v806 = vadd.f32 %v337, %v805
    %v807 = vpop.f32.mrb[0].mxu0
    %v808 = vpop.f32.mrb[0].mxu0
    %v809 = vpop.f32.mrb[0].mxu0
    %810 = vdwg.mxu0
    %v811 = vxor.u32 %v806, 2147483648
    %v812 = vmul.f32 %v811, 1.442695
    %v813 = vpow.pop %v812
    %v814 = vadd.f32 %v813, 1.0
    %v815 = vrcp.pop %v814
    %v816 = vmul.f32 1.0, %v815
    %v817 = vtanh.pop %v806
    %v818 = vmul.f32 %v816, %v628
    %820 = vrot.lane.b32.xlu0 %v817, 32
    %v821 = vpop.permute.xlu0 %820
    %v823 = vmul.f32 %v816, %v821
    %825 = vrot.lane.b32.xlu0 %v823, 32
    %v826 = vpop.permute.xlu0 %825
    %v828 = vadd.f32 %v818, %v826
    %v829 = vtanh.pop %v828
    %831 = vrot.lane.b32.xlu0 %v829, 32
    %v832 = vpop.permute.xlu0 %831
    %v834 = vmul.f32 %v816, %v832
    %v835 = vpack.c.bf16 %v749, %v749
    %v836 = vpack.c.bf16 %v750, %v750
    %v839 = vunpack.c.l.b16 %v835
    %v840 = vunpack.c.l.b16 %v836
    %v841 = vrot.slane %v839, 3
    %v842 = vrot.slane %v840, 2
    %v843 = vsel %vm203, %v842, %v841
    %v844 = vpack.c.b16 %v843, %v843
    %845 = vrot.lane.b32.xlu0 %v844, 64
    %v846 = vpop.permute.xlu0 %845
    %v848 = vsel %vm220, %v846, 0
    %850 = vmatprep.subr.bf16.mxu0 0
    %851 = vmatpush1.bf16.msra.mxu0 %v216
    %852 = vmatprep.subr.bf16.mxu0 0
    %853 = vmatpush1.bf16.msra.mxu0 %v217
    %854 = vmatprep.subr.bf16.mxu0 0
    %855 = vmatpush1.bf16.msra.mxu0 0
    %856 = vmatprep.subr.bf16.mxu0 0
    %857 = vmatpush1.bf16.msra.mxu0 0
    %858 = vmatprep.subr.bf16.mxu0 0
    %859 = vmatpush1.bf16.msra.mxu0 0
    %860 = vmatprep.subr.bf16.mxu0 0
    %861 = vmatpush1.bf16.msra.mxu0 0
    %862 = vmatprep.subr.bf16.mxu0 0
    %863 = vmatpush1.bf16.msra.mxu0 0
    %864 = vmatprep.subr.bf16.mxu0 0
    %865 = vmatpush1.bf16.msra.mxu0 0
    %866 = vmatprep.subr.bf16.mxu0 0
    %867 = vmatpush1.bf16.msra.mxu0 0
    %868 = vmatprep.subr.bf16.mxu0 0
    %869 = vmatpush1.bf16.msra.mxu0 0
    %870 = vmatprep.subr.bf16.mxu0 0
    %871 = vmatpush1.bf16.msra.mxu0 0
    %872 = vmatprep.subr.bf16.mxu0 0
    %873 = vmatpush1.bf16.msra.mxu0 0
    %874 = vmatprep.subr.bf16.mxu0 0
    %875 = vmatpush1.bf16.msra.mxu0 0
    %876 = vmatprep.subr.bf16.mxu0 0
    %877 = vmatpush1.bf16.msra.mxu0 0
    %878 = vmatprep.subr.bf16.mxu0 0
    %879 = vmatpush1.bf16.msra.mxu0 0
    %880 = vmatprep.subr.bf16.mxu0 0
    %881 = vmatpush1.bf16.msra.mxu0 0
    %882 = vmatprep.mubr.bf16.mxu0 0
    %883 = vmatmul.mubr.bf16.gmra.mrb[0].mxu0 %v848
    %v884 = vpop.f32.mrb[0].mxu0
    %v885 = vadd.f32 0.0, %v884
    %v886 = vpop.f32.mrb[0].mxu0
    %v887 = vpop.f32.mrb[0].mxu0
    %v888 = vpop.f32.mrb[0].mxu0
    %889 = vdwg.mxu0
    %v891 = vrot.slane %v885, 4
    %v892 = vrot.slane %v885, 5
    %v895 = vadd.f32 %v128, %v891
    %v896 = vadd.f32 %v131, %v892
    %v897 = vxor.u32 %v895, 2147483648
    %v898 = vxor.u32 %v896, 2147483648
    %v899 = vmul.f32 %v897, 1.442695
    %v900 = vpow.pop %v899
    %v901 = vmul.f32 %v898, 1.442695
    %v902 = vpow.pop %v901
    %v903 = vadd.f32 %v900, 1.0
    %v904 = vadd.f32 %v902, 1.0
    %v905 = vrcp.pop %v903
    %v906 = vmul.f32 1.0, %v905
    %v907 = vrcp.pop %v904
    %v908 = vmul.f32 1.0, %v907
    %v909 = vtanh.pop %v895
    %v910 = vtanh.pop %v896
    %v913 = vrot.slane %v737, 7
    %v914 = vrot.slane %v738, 7
    %v917 = vmul.f32 %v906, %v913
    %v918 = vmul.f32 %v908, %v914
    %921 = vrot.lane.b32.xlu0 %v909, 32
    %v922 = vpop.permute.xlu0 %921
    %923 = vrot.lane.b32.xlu0 %v910, 32
    %v924 = vpop.permute.xlu0 %923
    %v927 = vmul.f32 %v906, %v922
    %v928 = vmul.f32 %v908, %v924
    %931 = vrot.lane.b32.xlu0 %v927, 32
    %v932 = vpop.permute.xlu0 %931
    %933 = vrot.lane.b32.xlu0 %v928, 32
    %v934 = vpop.permute.xlu0 %933
    %v937 = vadd.f32 %v917, %v932
    %v938 = vadd.f32 %v918, %v934
    %v939 = vtanh.pop %v937
    %v940 = vtanh.pop %v938
    %943 = vrot.lane.b32.xlu0 %v939, 32
    %v944 = vpop.permute.xlu0 %943
    %945 = vrot.lane.b32.xlu0 %v940, 32
    %v946 = vpop.permute.xlu0 %945
    %v949 = vmul.f32 %v906, %v944
    %v950 = vmul.f32 %v908, %v946
    %v953 = vrot.slane %v750, 7
    %vm954 = vcmask 1044484
    %v955 = vsel %vm954, %v953, %v749
    %956 = vrot.lane.b32.xlu0 %v955, 64
    %v957 = vpop.permute.xlu0 %956
    %v960 = vrot.slane %v834, 5
    %961 = vrot.lane.b32.xlu0 %v960, 96
    %v962 = vpop.permute.xlu0 %961
    %v964 = vsel %vm220, %v957, %v962
    %v965 = vpack.c.bf16 %v964, %v964
    %v967 = vshrl.u32 %v965, 16
    %v969 = vrot.slane %v967, 1
    %v970 = vshll.u32 %v965, 16
    %v972 = vrot.slane %v970, 2
    %v973 = vor.u32 %v969, %v972
    %v975 = vsel %vm363, %v973, 0
    %977 = vmatprep.subr.bf16.mxu0 0
    %978 = vmatpush1.bf16.msra.mxu0 %v355
    %979 = vmatprep.subr.bf16.mxu0 0
    %980 = vmatpush1.bf16.msra.mxu0 %v356
    %981 = vmatprep.subr.bf16.mxu0 0
    %982 = vmatpush1.bf16.msra.mxu0 %v357
    %983 = vmatprep.subr.bf16.mxu0 0
    %984 = vmatpush1.bf16.msra.mxu0 %v358
    %985 = vmatprep.subr.bf16.mxu0 0
    %986 = vmatpush1.bf16.msra.mxu0 0
    %987 = vmatprep.subr.bf16.mxu0 0
    %988 = vmatpush1.bf16.msra.mxu0 0
    %989 = vmatprep.subr.bf16.mxu0 0
    %990 = vmatpush1.bf16.msra.mxu0 0
    %991 = vmatprep.subr.bf16.mxu0 0
    %992 = vmatpush1.bf16.msra.mxu0 0
    %993 = vmatprep.subr.bf16.mxu0 0
    %994 = vmatpush1.bf16.msra.mxu0 0
    %995 = vmatprep.subr.bf16.mxu0 0
    %996 = vmatpush1.bf16.msra.mxu0 0
    %997 = vmatprep.subr.bf16.mxu0 0
    %998 = vmatpush1.bf16.msra.mxu0 0
    %999 = vmatprep.subr.bf16.mxu0 0
    %1000 = vmatpush1.bf16.msra.mxu0 0
    %1001 = vmatprep.subr.bf16.mxu0 0
    %1002 = vmatpush1.bf16.msra.mxu0 0
    %1003 = vmatprep.subr.bf16.mxu0 0
    %1004 = vmatpush1.bf16.msra.mxu0 0
    %1005 = vmatprep.subr.bf16.mxu0 0
    %1006 = vmatpush1.bf16.msra.mxu0 0
    %1007 = vmatprep.subr.bf16.mxu0 0
    %1008 = vmatpush1.bf16.msra.mxu0 0
    %1009 = vmatprep.mubr.bf16.mxu0 0
    %1010 = vmatmul.mubr.bf16.gmra.mrb[0].mxu0 %v975
    %v1011 = vpop.f32.mrb[0].mxu0
    %v1012 = vadd.f32 %v337, %v1011
    %v1013 = vpop.f32.mrb[0].mxu0
    %v1014 = vpop.f32.mrb[0].mxu0
    %v1015 = vpop.f32.mrb[0].mxu0
    %1016 = vdwg.mxu0
    %v1017 = vxor.u32 %v1012, 2147483648
    %v1018 = vmul.f32 %v1017, 1.442695
    %v1019 = vpow.pop %v1018
    %v1020 = vadd.f32 %v1019, 1.0
    %v1021 = vrcp.pop %v1020
    %v1022 = vmul.f32 1.0, %v1021
    %v1023 = vtanh.pop %v1012
    %v1024 = vmul.f32 %v1022, %v828
    %1026 = vrot.lane.b32.xlu0 %v1023, 32
    %v1027 = vpop.permute.xlu0 %1026
    %v1029 = vmul.f32 %v1022, %v1027
    %1031 = vrot.lane.b32.xlu0 %v1029, 32
    %v1032 = vpop.permute.xlu0 %1031
    %v1034 = vadd.f32 %v1024, %v1032
    %v1035 = vtanh.pop %v1034
    %1037 = vrot.lane.b32.xlu0 %v1035, 32
    %v1038 = vpop.permute.xlu0 %1037
    %v1040 = vmul.f32 %v1022, %v1038
    %v1041 = vpack.c.bf16 %v949, %v949
    %v1042 = vpack.c.bf16 %v950, %v950
    %v1045 = vunpack.c.l.b16 %v1041
    %v1046 = vunpack.c.l.b16 %v1042
    %v1047 = vrot.slane %v1045, 4
    %v1048 = vrot.slane %v1046, 3
    %v1049 = vsel %vm203, %v1048, %v1047
    %v1050 = vpack.c.b16 %v1049, %v1049
    %1051 = vrot.lane.b32.xlu0 %v1050, 64
    %v1052 = vpop.permute.xlu0 %1051
    %v1054 = vsel %vm220, %v1052, 0
    %1056 = vmatprep.subr.bf16.mxu0 0
    %1057 = vmatpush1.bf16.msra.mxu0 %v216
    %1058 = vmatprep.subr.bf16.mxu0 0
    %1059 = vmatpush1.bf16.msra.mxu0 %v217
    %1060 = vmatprep.subr.bf16.mxu0 0
    %1061 = vmatpush1.bf16.msra.mxu0 0
    %1062 = vmatprep.subr.bf16.mxu0 0
    %1063 = vmatpush1.bf16.msra.mxu0 0
    %1064 = vmatprep.subr.bf16.mxu0 0
    %1065 = vmatpush1.bf16.msra.mxu0 0
    %1066 = vmatprep.subr.bf16.mxu0 0
    %1067 = vmatpush1.bf16.msra.mxu0 0
    %1068 = vmatprep.subr.bf16.mxu0 0
    %1069 = vmatpush1.bf16.msra.mxu0 0
    %1070 = vmatprep.subr.bf16.mxu0 0
    %1071 = vmatpush1.bf16.msra.mxu0 0
    %1072 = vmatprep.subr.bf16.mxu0 0
    %1073 = vmatpush1.bf16.msra.mxu0 0
    %1074 = vmatprep.subr.bf16.mxu0 0
    %1075 = vmatpush1.bf16.msra.mxu0 0
    %1076 = vmatprep.subr.bf16.mxu0 0
    %1077 = vmatpush1.bf16.msra.mxu0 0
    %1078 = vmatprep.subr.bf16.mxu0 0
    %1079 = vmatpush1.bf16.msra.mxu0 0
    %1080 = vmatprep.subr.bf16.mxu0 0
    %1081 = vmatpush1.bf16.msra.mxu0 0
    %1082 = vmatprep.subr.bf16.mxu0 0
    %1083 = vmatpush1.bf16.msra.mxu0 0
    %1084 = vmatprep.subr.bf16.mxu0 0
    %1085 = vmatpush1.bf16.msra.mxu0 0
    %1086 = vmatprep.subr.bf16.mxu0 0
    %1087 = vmatpush1.bf16.msra.mxu0 0
    %1088 = vmatprep.mubr.bf16.mxu0 0
    %1089 = vmatmul.mubr.bf16.gmra.mrb[0].mxu0 %v1054
    %v1090 = vpop.f32.mrb[0].mxu0
    %v1091 = vadd.f32 0.0, %v1090
    %v1092 = vpop.f32.mrb[0].mxu0
    %v1093 = vpop.f32.mrb[0].mxu0
    %v1094 = vpop.f32.mrb[0].mxu0
    %1095 = vdwg.mxu0
    %v1097 = vrot.slane %v1091, 3
    %v1098 = vrot.slane %v1091, 4
    %v1101 = vadd.f32 %v128, %v1097
    %v1102 = vadd.f32 %v131, %v1098
    %v1103 = vxor.u32 %v1101, 2147483648
    %v1104 = vxor.u32 %v1102, 2147483648
    %v1105 = vmul.f32 %v1103, 1.442695
    %v1106 = vpow.pop %v1105
    %v1107 = vmul.f32 %v1104, 1.442695
    %v1108 = vpow.pop %v1107
    %v1109 = vadd.f32 %v1106, 1.0
    %v1110 = vadd.f32 %v1108, 1.0
    %v1111 = vrcp.pop %v1109
    %v1112 = vmul.f32 1.0, %v1111
    %v1113 = vrcp.pop %v1110
    %v1114 = vmul.f32 1.0, %v1113
    %v1115 = vtanh.pop %v1101
    %v1116 = vtanh.pop %v1102
    %v1119 = vrot.slane %v937, 7
    %v1120 = vrot.slane %v938, 7
    %v1123 = vmul.f32 %v1112, %v1119
    %v1124 = vmul.f32 %v1114, %v1120
    %1127 = vrot.lane.b32.xlu0 %v1115, 32
    %v1128 = vpop.permute.xlu0 %1127
    %1129 = vrot.lane.b32.xlu0 %v1116, 32
    %v1130 = vpop.permute.xlu0 %1129
    %v1133 = vmul.f32 %v1112, %v1128
    %v1134 = vmul.f32 %v1114, %v1130
    %1137 = vrot.lane.b32.xlu0 %v1133, 32
    %v1138 = vpop.permute.xlu0 %1137
    %1139 = vrot.lane.b32.xlu0 %v1134, 32
    %v1140 = vpop.permute.xlu0 %1139
    %v1143 = vadd.f32 %v1123, %v1138
    %v1144 = vadd.f32 %v1124, %v1140
    %v1145 = vtanh.pop %v1143
    %v1146 = vtanh.pop %v1144
    %1149 = vrot.lane.b32.xlu0 %v1145, 32
    %v1150 = vpop.permute.xlu0 %1149
    %1151 = vrot.lane.b32.xlu0 %v1146, 32
    %v1152 = vpop.permute.xlu0 %1151
    %v1155 = vmul.f32 %v1112, %v1150
    %v1156 = vmul.f32 %v1114, %v1152
    %v1159 = vrot.slane %v950, 7
    %vm1160 = vcmask 1045509
    %v1161 = vsel %vm1160, %v1159, %v949
    %1162 = vrot.lane.b32.xlu0 %v1161, 64
    %v1163 = vpop.permute.xlu0 %1162
    %v1166 = vrot.slane %v1040, 4
    %1167 = vrot.lane.b32.xlu0 %v1166, 96
    %v1168 = vpop.permute.xlu0 %1167
    %v1170 = vsel %vm220, %v1163, %v1168
    %v1171 = vpack.c.bf16 %v1170, %v1170
    %v1173 = vrot.slane %v1171, 2
    %v1175 = vsel %vm363, %v1173, 0
    %1177 = vmatprep.subr.bf16.mxu0 0
    %1178 = vmatpush1.bf16.msra.mxu0 %v355
    %1179 = vmatprep.subr.bf16.mxu0 0
    %1180 = vmatpush1.bf16.msra.mxu0 %v356
    %1181 = vmatprep.subr.bf16.mxu0 0
    %1182 = vmatpush1.bf16.msra.mxu0 %v357
    %1183 = vmatprep.subr.bf16.mxu0 0
    %1184 = vmatpush1.bf16.msra.mxu0 %v358
    %1185 = vmatprep.subr.bf16.mxu0 0
    %1186 = vmatpush1.bf16.msra.mxu0 0
    %1187 = vmatprep.subr.bf16.mxu0 0
    %1188 = vmatpush1.bf16.msra.mxu0 0
    %1189 = vmatprep.subr.bf16.mxu0 0
    %1190 = vmatpush1.bf16.msra.mxu0 0
    %1191 = vmatprep.subr.bf16.mxu0 0
    %1192 = vmatpush1.bf16.msra.mxu0 0
    %1193 = vmatprep.subr.bf16.mxu0 0
    %1194 = vmatpush1.bf16.msra.mxu0 0
    %1195 = vmatprep.subr.bf16.mxu0 0
    %1196 = vmatpush1.bf16.msra.mxu0 0
    %1197 = vmatprep.subr.bf16.mxu0 0
    %1198 = vmatpush1.bf16.msra.mxu0 0
    %1199 = vmatprep.subr.bf16.mxu0 0
    %1200 = vmatpush1.bf16.msra.mxu0 0
    %1201 = vmatprep.subr.bf16.mxu0 0
    %1202 = vmatpush1.bf16.msra.mxu0 0
    %1203 = vmatprep.subr.bf16.mxu0 0
    %1204 = vmatpush1.bf16.msra.mxu0 0
    %1205 = vmatprep.subr.bf16.mxu0 0
    %1206 = vmatpush1.bf16.msra.mxu0 0
    %1207 = vmatprep.subr.bf16.mxu0 0
    %1208 = vmatpush1.bf16.msra.mxu0 0
    %1209 = vmatprep.mubr.bf16.mxu0 0
    %1210 = vmatmul.mubr.bf16.gmra.mrb[0].mxu0 %v1175
    %v1211 = vpop.f32.mrb[0].mxu0
    %v1212 = vadd.f32 %v337, %v1211
    %v1213 = vpop.f32.mrb[0].mxu0
    %v1214 = vpop.f32.mrb[0].mxu0
    %v1215 = vpop.f32.mrb[0].mxu0
    %1216 = vdwg.mxu0
    %v1217 = vxor.u32 %v1212, 2147483648
    %v1218 = vmul.f32 %v1217, 1.442695
    %v1219 = vpow.pop %v1218
    %v1220 = vadd.f32 %v1219, 1.0
    %v1221 = vrcp.pop %v1220
    %v1222 = vmul.f32 1.0, %v1221
    %v1223 = vtanh.pop %v1212
    %v1224 = vmul.f32 %v1222, %v1034
    %1226 = vrot.lane.b32.xlu0 %v1223, 32
    %v1227 = vpop.permute.xlu0 %1226
    %v1229 = vmul.f32 %v1222, %v1227
    %1231 = vrot.lane.b32.xlu0 %v1229, 32
    %v1232 = vpop.permute.xlu0 %1231
    %v1234 = vadd.f32 %v1224, %v1232
    %v1235 = vtanh.pop %v1234
    %1237 = vrot.lane.b32.xlu0 %v1235, 32
    %v1238 = vpop.permute.xlu0 %1237
    %v1240 = vmul.f32 %v1222, %v1238
    %v1242 = vlaneseq
    %v1243 = vshrl.u32 %v1242, 7
    %v1244 = vsub.s32 0, %v1243
    %v1245 = vrot.slane %v147, %v1244
    %1246 = vrot.lane.b32.xlu0 %v1245, 64
    %v1247 = vpop.permute.xlu0 %1246
    %v1249 = vmul.f32 %v1240, %v1247
    %1251 = vrot.lane.b32.xlu0 %v1249, 64
    %v1252 = vpop.permute.xlu0 %1251
    %vm1254 = vcmask 254976
    %v1255 = vsel %vm1254, %v1252, 0.0
    %1256 = vadd.xlane.f32.xlu0 %v1255
    %v1257 = vpop.xlane.xlu0 %1256
    %v1258 = vpack.c.bf16 %v1155, %v1155
    %v1259 = vpack.c.bf16 %v1156, %v1156
    %v1262 = vunpack.c.l.b16 %v1258
    %v1263 = vunpack.c.l.b16 %v1259
    %v1264 = vrot.slane %v1262, 5
    %v1265 = vrot.slane %v1263, 4
    %v1266 = vsel %vm203, %v1265, %v1264
    %v1267 = vpack.c.b16 %v1266, %v1266
    %1268 = vrot.lane.b32.xlu0 %v1267, 64
    %v1269 = vpop.permute.xlu0 %1268
    %v1271 = vsel %vm220, %v1269, 0
    %1273 = vmatprep.subr.bf16.mxu0 0
    %1274 = vmatpush1.bf16.msra.mxu0 %v216
    %1275 = vmatprep.subr.bf16.mxu0 0
    %1276 = vmatpush1.bf16.msra.mxu0 %v217
    %1277 = vmatprep.subr.bf16.mxu0 0
    %1278 = vmatpush1.bf16.msra.mxu0 0
    %1279 = vmatprep.subr.bf16.mxu0 0
    %1280 = vmatpush1.bf16.msra.mxu0 0
    %1281 = vmatprep.subr.bf16.mxu0 0
    %1282 = vmatpush1.bf16.msra.mxu0 0
    %1283 = vmatprep.subr.bf16.mxu0 0
    %1284 = vmatpush1.bf16.msra.mxu0 0
    %1285 = vmatprep.subr.bf16.mxu0 0
    %1286 = vmatpush1.bf16.msra.mxu0 0
    %1287 = vmatprep.subr.bf16.mxu0 0
    %1288 = vmatpush1.bf16.msra.mxu0 0
    %1289 = vmatprep.subr.bf16.mxu0 0
    %1290 = vmatpush1.bf16.msra.mxu0 0
    %1291 = vmatprep.subr.bf16.mxu0 0
    %1292 = vmatpush1.bf16.msra.mxu0 0
    %1293 = vmatprep.subr.bf16.mxu0 0
    %1294 = vmatpush1.bf16.msra.mxu0 0
    %1295 = vmatprep.subr.bf16.mxu0 0
    %1296 = vmatpush1.bf16.msra.mxu0 0
    %1297 = vmatprep.subr.bf16.mxu0 0
    %1298 = vmatpush1.bf16.msra.mxu0 0
    %1299 = vmatprep.subr.bf16.mxu0 0
    %1300 = vmatpush1.bf16.msra.mxu0 0
    %1301 = vmatprep.subr.bf16.mxu0 0
    %1302 = vmatpush1.bf16.msra.mxu0 0
    %1303 = vmatprep.subr.bf16.mxu0 0
    %1304 = vmatpush1.bf16.msra.mxu0 0
    %1305 = vmatprep.mubr.bf16.mxu0 0
    %1306 = vmatmul.mubr.bf16.gmra.mrb[0].mxu0 %v1271
    %v1307 = vpop.f32.mrb[0].mxu0
    %v1308 = vadd.f32 0.0, %v1307
    %v1309 = vpop.f32.mrb[0].mxu0
    %v1310 = vpop.f32.mrb[0].mxu0
    %v1311 = vpop.f32.mrb[0].mxu0
    %1312 = vdwg.mxu0
    %v1314 = vrot.slane %v1308, 2
    %v1315 = vrot.slane %v1308, 3
    %v1318 = vadd.f32 %v128, %v1314
    %v1319 = vadd.f32 %v131, %v1315
    %v1320 = vxor.u32 %v1318, 2147483648
    %v1321 = vxor.u32 %v1319, 2147483648
    %v1322 = vmul.f32 %v1320, 1.442695
    %v1323 = vpow.pop %v1322
    %v1324 = vmul.f32 %v1321, 1.442695
    %v1325 = vpow.pop %v1324
    %v1326 = vadd.f32 %v1323, 1.0
    %v1327 = vadd.f32 %v1325, 1.0
    %v1328 = vrcp.pop %v1326
    %v1329 = vmul.f32 1.0, %v1328
    %v1330 = vrcp.pop %v1327
    %v1331 = vmul.f32 1.0, %v1330
    %v1332 = vtanh.pop %v1318
    %v1333 = vtanh.pop %v1319
    %v1336 = vrot.slane %v1143, 7
    %v1337 = vrot.slane %v1144, 7
    %v1340 = vmul.f32 %v1329, %v1336
    %v1341 = vmul.f32 %v1331, %v1337
    %1344 = vrot.lane.b32.xlu0 %v1332, 32
    %v1345 = vpop.permute.xlu0 %1344
    %1346 = vrot.lane.b32.xlu0 %v1333, 32
    %v1347 = vpop.permute.xlu0 %1346
    %v1350 = vmul.f32 %v1329, %v1345
    %v1351 = vmul.f32 %v1331, %v1347
    %1354 = vrot.lane.b32.xlu0 %v1350, 32
    %v1355 = vpop.permute.xlu0 %1354
    %1356 = vrot.lane.b32.xlu0 %v1351, 32
    %v1357 = vpop.permute.xlu0 %1356
    %v1360 = vadd.f32 %v1340, %v1355
    %v1361 = vadd.f32 %v1341, %v1357
    %v1362 = vtanh.pop %v1360
    %v1363 = vtanh.pop %v1361
    %1366 = vrot.lane.b32.xlu0 %v1362, 32
    %v1367 = vpop.permute.xlu0 %1366
    %1368 = vrot.lane.b32.xlu0 %v1363, 32
    %v1369 = vpop.permute.xlu0 %1368
    %v1372 = vmul.f32 %v1329, %v1367
    %v1373 = vmul.f32 %v1331, %v1369
    %v1376 = vrot.slane %v1156, 7
    %vm1377 = vcmask 1046534
    %v1378 = vsel %vm1377, %v1376, %v1155
    %1379 = vrot.lane.b32.xlu0 %v1378, 64
    %v1380 = vpop.permute.xlu0 %1379
    %v1383 = vrot.slane %v1240, 3
    %1384 = vrot.lane.b32.xlu0 %v1383, 96
    %v1385 = vpop.permute.xlu0 %1384
    %v1387 = vsel %vm220, %v1380, %v1385
    %v1388 = vpack.c.bf16 %v1387, %v1387
    %v1390 = vshrl.u32 %v1388, 16
    %v1392 = vrot.slane %v1390, 2
    %v1393 = vshll.u32 %v1388, 16
    %v1395 = vrot.slane %v1393, 3
    %v1396 = vor.u32 %v1392, %v1395
    %v1398 = vsel %vm363, %v1396, 0
    %1400 = vmatprep.subr.bf16.mxu0 0
    %1401 = vmatpush1.bf16.msra.mxu0 %v355
    %1402 = vmatprep.subr.bf16.mxu0 0
    %1403 = vmatpush1.bf16.msra.mxu0 %v356
    %1404 = vmatprep.subr.bf16.mxu0 0
    %1405 = vmatpush1.bf16.msra.mxu0 %v357
    %1406 = vmatprep.subr.bf16.mxu0 0
    %1407 = vmatpush1.bf16.msra.mxu0 %v358
    %1408 = vmatprep.subr.bf16.mxu0 0
    %1409 = vmatpush1.bf16.msra.mxu0 0
    %1410 = vmatprep.subr.bf16.mxu0 0
    %1411 = vmatpush1.bf16.msra.mxu0 0
    %1412 = vmatprep.subr.bf16.mxu0 0
    %1413 = vmatpush1.bf16.msra.mxu0 0
    %1414 = vmatprep.subr.bf16.mxu0 0
    %1415 = vmatpush1.bf16.msra.mxu0 0
    %1416 = vmatprep.subr.bf16.mxu0 0
    %1417 = vmatpush1.bf16.msra.mxu0 0
    %1418 = vmatprep.subr.bf16.mxu0 0
    %1419 = vmatpush1.bf16.msra.mxu0 0
    %1420 = vmatprep.subr.bf16.mxu0 0
    %1421 = vmatpush1.bf16.msra.mxu0 0
    %1422 = vmatprep.subr.bf16.mxu0 0
    %1423 = vmatpush1.bf16.msra.mxu0 0
    %1424 = vmatprep.subr.bf16.mxu0 0
    %1425 = vmatpush1.bf16.msra.mxu0 0
    %1426 = vmatprep.subr.bf16.mxu0 0
    %1427 = vmatpush1.bf16.msra.mxu0 0
    %1428 = vmatprep.subr.bf16.mxu0 0
    %1429 = vmatpush1.bf16.msra.mxu0 0
    %1430 = vmatprep.subr.bf16.mxu0 0
    %1431 = vmatpush1.bf16.msra.mxu0 0
    %1432 = vmatprep.mubr.bf16.mxu0 0
    %1433 = vmatmul.mubr.bf16.gmra.mrb[0].mxu0 %v1398
    %v1434 = vpop.f32.mrb[0].mxu0
    %v1435 = vadd.f32 %v337, %v1434
    %v1436 = vpop.f32.mrb[0].mxu0
    %v1437 = vpop.f32.mrb[0].mxu0
    %v1438 = vpop.f32.mrb[0].mxu0
    %1439 = vdwg.mxu0
    %v1440 = vxor.u32 %v1435, 2147483648
    %v1441 = vmul.f32 %v1440, 1.442695
    %v1442 = vpow.pop %v1441
    %v1443 = vadd.f32 %v1442, 1.0
    %v1444 = vrcp.pop %v1443
    %v1445 = vmul.f32 1.0, %v1444
    %v1446 = vtanh.pop %v1435
    %v1447 = vmul.f32 %v1445, %v1234
    %1449 = vrot.lane.b32.xlu0 %v1446, 32
    %v1450 = vpop.permute.xlu0 %1449
    %v1452 = vmul.f32 %v1445, %v1450
    %1454 = vrot.lane.b32.xlu0 %v1452, 32
    %v1455 = vpop.permute.xlu0 %1454
    %v1457 = vadd.f32 %v1447, %v1455
    %v1458 = vtanh.pop %v1457
    %1460 = vrot.lane.b32.xlu0 %v1458, 32
    %v1461 = vpop.permute.xlu0 %1460
    %v1463 = vmul.f32 %v1445, %v1461
    %v1464 = vmul.f32 %v1463, %v1247
    %1466 = vrot.lane.b32.xlu0 %v1464, 64
    %v1467 = vpop.permute.xlu0 %1466
    %v1469 = vsel %vm1254, %v1467, 0.0
    %1470 = vadd.xlane.f32.xlu0 %v1469
    %v1471 = vpop.xlane.xlu0 %1470
    %v1472 = vpack.c.bf16 %v1372, %v1372
    %v1473 = vpack.c.bf16 %v1373, %v1373
    %v1476 = vunpack.c.l.b16 %v1472
    %v1477 = vunpack.c.l.b16 %v1473
    %v1478 = vrot.slane %v1476, 6
    %v1479 = vrot.slane %v1477, 5
    %v1480 = vsel %vm203, %v1479, %v1478
    %v1481 = vpack.c.b16 %v1480, %v1480
    %1482 = vrot.lane.b32.xlu0 %v1481, 64
    %v1483 = vpop.permute.xlu0 %1482
    %v1485 = vsel %vm220, %v1483, 0
    %1487 = vmatprep.subr.bf16.mxu0 0
    %1488 = vmatpush1.bf16.msra.mxu0 %v216
    %1489 = vmatprep.subr.bf16.mxu0 0
    %1490 = vmatpush1.bf16.msra.mxu0 %v217
    %1491 = vmatprep.subr.bf16.mxu0 0
    %1492 = vmatpush1.bf16.msra.mxu0 0
    %1493 = vmatprep.subr.bf16.mxu0 0
    %1494 = vmatpush1.bf16.msra.mxu0 0
    %1495 = vmatprep.subr.bf16.mxu0 0
    %1496 = vmatpush1.bf16.msra.mxu0 0
    %1497 = vmatprep.subr.bf16.mxu0 0
    %1498 = vmatpush1.bf16.msra.mxu0 0
    %1499 = vmatprep.subr.bf16.mxu0 0
    %1500 = vmatpush1.bf16.msra.mxu0 0
    %1501 = vmatprep.subr.bf16.mxu0 0
    %1502 = vmatpush1.bf16.msra.mxu0 0
    %1503 = vmatprep.subr.bf16.mxu0 0
    %1504 = vmatpush1.bf16.msra.mxu0 0
    %1505 = vmatprep.subr.bf16.mxu0 0
    %1506 = vmatpush1.bf16.msra.mxu0 0
    %1507 = vmatprep.subr.bf16.mxu0 0
    %1508 = vmatpush1.bf16.msra.mxu0 0
    %1509 = vmatprep.subr.bf16.mxu0 0
    %1510 = vmatpush1.bf16.msra.mxu0 0
    %1511 = vmatprep.subr.bf16.mxu0 0
    %1512 = vmatpush1.bf16.msra.mxu0 0
    %1513 = vmatprep.subr.bf16.mxu0 0
    %1514 = vmatpush1.bf16.msra.mxu0 0
    %1515 = vmatprep.subr.bf16.mxu0 0
    %1516 = vmatpush1.bf16.msra.mxu0 0
    %1517 = vmatprep.subr.bf16.mxu0 0
    %1518 = vmatpush1.bf16.msra.mxu0 0
    %1519 = vmatprep.mubr.bf16.mxu0 0
    %1520 = vmatmul.mubr.bf16.gmra.mrb[0].mxu0 %v1485
    %v1521 = vpop.f32.mrb[0].mxu0
    %v1522 = vadd.f32 0.0, %v1521
    %v1523 = vpop.f32.mrb[0].mxu0
    %v1524 = vpop.f32.mrb[0].mxu0
    %v1525 = vpop.f32.mrb[0].mxu0
    %1526 = vdwg.mxu0
    %v1528 = vrot.slane %v1522, 1
    %v1529 = vrot.slane %v1522, 2
    %v1532 = vadd.f32 %v128, %v1528
    %v1533 = vadd.f32 %v131, %v1529
    %v1534 = vxor.u32 %v1532, 2147483648
    %v1535 = vxor.u32 %v1533, 2147483648
    %v1536 = vmul.f32 %v1534, 1.442695
    %v1537 = vpow.pop %v1536
    %v1538 = vmul.f32 %v1535, 1.442695
    %v1539 = vpow.pop %v1538
    %v1540 = vadd.f32 %v1537, 1.0
    %v1541 = vadd.f32 %v1539, 1.0
    %v1542 = vrcp.pop %v1540
    %v1543 = vmul.f32 1.0, %v1542
    %v1544 = vrcp.pop %v1541
    %v1545 = vmul.f32 1.0, %v1544
    %v1546 = vtanh.pop %v1532
    %v1547 = vtanh.pop %v1533
    %v1550 = vrot.slane %v1360, 7
    %v1551 = vrot.slane %v1361, 7
    %v1554 = vmul.f32 %v1543, %v1550
    %v1555 = vmul.f32 %v1545, %v1551
    %1558 = vrot.lane.b32.xlu0 %v1546, 32
    %v1559 = vpop.permute.xlu0 %1558
    %1560 = vrot.lane.b32.xlu0 %v1547, 32
    %v1561 = vpop.permute.xlu0 %1560
    %v1564 = vmul.f32 %v1543, %v1559
    %v1565 = vmul.f32 %v1545, %v1561
    %1568 = vrot.lane.b32.xlu0 %v1564, 32
    %v1569 = vpop.permute.xlu0 %1568
    %1570 = vrot.lane.b32.xlu0 %v1565, 32
    %v1571 = vpop.permute.xlu0 %1570
    %v1574 = vadd.f32 %v1554, %v1569
    %v1575 = vadd.f32 %v1555, %v1571
    %v1576 = vtanh.pop %v1574
    %v1577 = vtanh.pop %v1575
    %1580 = vrot.lane.b32.xlu0 %v1576, 32
    %v1581 = vpop.permute.xlu0 %1580
    %1582 = vrot.lane.b32.xlu0 %v1577, 32
    %v1583 = vpop.permute.xlu0 %1582
    %v1586 = vmul.f32 %v1543, %v1581
    %v1587 = vmul.f32 %v1545, %v1583
    %v1590 = vrot.slane %v1373, 7
    %vm1591 = vcmask 1047559
    %v1592 = vsel %vm1591, %v1590, %v1372
    %1593 = vrot.lane.b32.xlu0 %v1592, 64
    %v1594 = vpop.permute.xlu0 %1593
    %v1597 = vrot.slane %v1463, 2
    %1598 = vrot.lane.b32.xlu0 %v1597, 96
    %v1599 = vpop.permute.xlu0 %1598
    %v1601 = vsel %vm220, %v1594, %v1599
    %v1602 = vpack.c.bf16 %v1601, %v1601
    %v1604 = vrot.slane %v1602, 3
    %v1606 = vsel %vm363, %v1604, 0
    %1608 = vmatprep.subr.bf16.mxu0 0
    %1609 = vmatpush1.bf16.msra.mxu0 %v355
    %1610 = vmatprep.subr.bf16.mxu0 0
    %1611 = vmatpush1.bf16.msra.mxu0 %v356
    %1612 = vmatprep.subr.bf16.mxu0 0
    %1613 = vmatpush1.bf16.msra.mxu0 %v357
    %1614 = vmatprep.subr.bf16.mxu0 0
    %1615 = vmatpush1.bf16.msra.mxu0 %v358
    %1616 = vmatprep.subr.bf16.mxu0 0
    %1617 = vmatpush1.bf16.msra.mxu0 0
    %1618 = vmatprep.subr.bf16.mxu0 0
    %1619 = vmatpush1.bf16.msra.mxu0 0
    %1620 = vmatprep.subr.bf16.mxu0 0
    %1621 = vmatpush1.bf16.msra.mxu0 0
    %1622 = vmatprep.subr.bf16.mxu0 0
    %1623 = vmatpush1.bf16.msra.mxu0 0
    %1624 = vmatprep.subr.bf16.mxu0 0
    %1625 = vmatpush1.bf16.msra.mxu0 0
    %1626 = vmatprep.subr.bf16.mxu0 0
    %1627 = vmatpush1.bf16.msra.mxu0 0
    %1628 = vmatprep.subr.bf16.mxu0 0
    %1629 = vmatpush1.bf16.msra.mxu0 0
    %1630 = vmatprep.subr.bf16.mxu0 0
    %1631 = vmatpush1.bf16.msra.mxu0 0
    %1632 = vmatprep.subr.bf16.mxu0 0
    %1633 = vmatpush1.bf16.msra.mxu0 0
    %1634 = vmatprep.subr.bf16.mxu0 0
    %1635 = vmatpush1.bf16.msra.mxu0 0
    %1636 = vmatprep.subr.bf16.mxu0 0
    %1637 = vmatpush1.bf16.msra.mxu0 0
    %1638 = vmatprep.subr.bf16.mxu0 0
    %1639 = vmatpush1.bf16.msra.mxu0 0
    %1640 = vmatprep.mubr.bf16.mxu0 0
    %1641 = vmatmul.mubr.bf16.gmra.mrb[0].mxu0 %v1606
    %v1642 = vpop.f32.mrb[0].mxu0
    %v1643 = vadd.f32 %v337, %v1642
    %v1644 = vpop.f32.mrb[0].mxu0
    %v1645 = vpop.f32.mrb[0].mxu0
    %v1646 = vpop.f32.mrb[0].mxu0
    %1647 = vdwg.mxu0
    %v1648 = vxor.u32 %v1643, 2147483648
    %v1649 = vmul.f32 %v1648, 1.442695
    %v1650 = vpow.pop %v1649
    %v1651 = vadd.f32 %v1650, 1.0
    %v1652 = vrcp.pop %v1651
    %v1653 = vmul.f32 1.0, %v1652
    %v1654 = vtanh.pop %v1643
    %v1655 = vmul.f32 %v1653, %v1457
    %1657 = vrot.lane.b32.xlu0 %v1654, 32
    %v1658 = vpop.permute.xlu0 %1657
    %v1660 = vmul.f32 %v1653, %v1658
    %1662 = vrot.lane.b32.xlu0 %v1660, 32
    %v1663 = vpop.permute.xlu0 %1662
    %v1665 = vadd.f32 %v1655, %v1663
    %v1666 = vtanh.pop %v1665
    %1668 = vrot.lane.b32.xlu0 %v1666, 32
    %v1669 = vpop.permute.xlu0 %1668
    %v1671 = vmul.f32 %v1653, %v1669
    %v1672 = vmul.f32 %v1671, %v1247
    %1674 = vrot.lane.b32.xlu0 %v1672, 64
    %v1675 = vpop.permute.xlu0 %1674
    %v1677 = vsel %vm1254, %v1675, 0.0
    %1678 = vadd.xlane.f32.xlu0 %v1677
    %v1679 = vpop.xlane.xlu0 %1678
    %v1682 = vrot.slane %v1587, 7
    %1683 = vrot.lane.b32.xlu0 %v1586, 64
    %v1684 = vpop.permute.xlu0 %1683
    %1685 = vrot.lane.b32.xlu0 %v1682, 64
    %v1686 = vpop.permute.xlu0 %1685
    %v1690 = vrot.slane %v1671, 1
    %1691 = vrot.lane.b32.xlu0 %v1690, 96
    %v1692 = vpop.permute.xlu0 %1691
    %v1694 = vsel %vm220, %v1684, %v1692
    %v1695 = vsel %vm220, %v1686, %v1692
    %v1696 = vpack.c.bf16 %v1695, %v1694
    %v1698 = vshrl.u32 %v1696, 16
    %v1700 = vrot.slane %v1698, 3
    %v1701 = vshll.u32 %v1696, 16
    %v1703 = vrot.slane %v1701, 4
    %v1704 = vor.u32 %v1700, %v1703
    %v1706 = vsel %vm363, %v1704, 0
    %1708 = vmatprep.subr.bf16.mxu0 0
    %1709 = vmatpush1.bf16.msra.mxu0 %v355
    %1710 = vmatprep.subr.bf16.mxu0 0
    %1711 = vmatpush1.bf16.msra.mxu0 %v356
    %1712 = vmatprep.subr.bf16.mxu0 0
    %1713 = vmatpush1.bf16.msra.mxu0 %v357
    %1714 = vmatprep.subr.bf16.mxu0 0
    %1715 = vmatpush1.bf16.msra.mxu0 %v358
    %1716 = vmatprep.subr.bf16.mxu0 0
    %1717 = vmatpush1.bf16.msra.mxu0 0
    %1718 = vmatprep.subr.bf16.mxu0 0
    %1719 = vmatpush1.bf16.msra.mxu0 0
    %1720 = vmatprep.subr.bf16.mxu0 0
    %1721 = vmatpush1.bf16.msra.mxu0 0
    %1722 = vmatprep.subr.bf16.mxu0 0
    %1723 = vmatpush1.bf16.msra.mxu0 0
    %1724 = vmatprep.subr.bf16.mxu0 0
    %1725 = vmatpush1.bf16.msra.mxu0 0
    %1726 = vmatprep.subr.bf16.mxu0 0
    %1727 = vmatpush1.bf16.msra.mxu0 0
    %1728 = vmatprep.subr.bf16.mxu0 0
    %1729 = vmatpush1.bf16.msra.mxu0 0
    %1730 = vmatprep.subr.bf16.mxu0 0
    %1731 = vmatpush1.bf16.msra.mxu0 0
    %1732 = vmatprep.subr.bf16.mxu0 0
    %1733 = vmatpush1.bf16.msra.mxu0 0
    %1734 = vmatprep.subr.bf16.mxu0 0
    %1735 = vmatpush1.bf16.msra.mxu0 0
    %1736 = vmatprep.subr.bf16.mxu0 0
    %1737 = vmatpush1.bf16.msra.mxu0 0
    %1738 = vmatprep.subr.bf16.mxu0 0
    %1739 = vmatpush1.bf16.msra.mxu0 0
    %1740 = vmatprep.mubr.bf16.mxu0 0
    %1741 = vmatmul.mubr.bf16.gmra.mrb[0].mxu0 %v1706
    %v1742 = vpop.f32.mrb[0].mxu0
    %v1743 = vadd.f32 %v337, %v1742
    %v1744 = vpop.f32.mrb[0].mxu0
    %v1745 = vpop.f32.mrb[0].mxu0
    %v1746 = vpop.f32.mrb[0].mxu0
    %1747 = vdwg.mxu0
    %v1748 = vxor.u32 %v1743, 2147483648
    %v1749 = vmul.f32 %v1748, 1.442695
    %v1750 = vpow.pop %v1749
    %v1751 = vadd.f32 %v1750, 1.0
    %v1752 = vrcp.pop %v1751
    %v1753 = vmul.f32 1.0, %v1752
    %v1754 = vtanh.pop %v1743
    %v1755 = vmul.f32 %v1753, %v1665
    %1757 = vrot.lane.b32.xlu0 %v1754, 32
    %v1758 = vpop.permute.xlu0 %1757
    %v1760 = vmul.f32 %v1753, %v1758
    %1762 = vrot.lane.b32.xlu0 %v1760, 32
    %v1763 = vpop.permute.xlu0 %1762
    %v1765 = vadd.f32 %v1755, %v1763
    %v1766 = vtanh.pop %v1765
    %1768 = vrot.lane.b32.xlu0 %v1766, 32
    %v1769 = vpop.permute.xlu0 %1768
    %v1771 = vmul.f32 %v1753, %v1769
    %v1772 = vmul.f32 %v1771, %v1247
    %1774 = vrot.lane.b32.xlu0 %v1772, 64
    %v1775 = vpop.permute.xlu0 %1774
    %v1777 = vsel %vm1254, %v1775, 0.0
    %1778 = vadd.xlane.f32.xlu0 %v1777
    %v1779 = vpop.xlane.xlu0 %1778
    %vm1780 = vcmask 7168
    %v1781 = vsel %vm1780, %v1257, %v1471
    %vm1782 = vcmask 15360
    %v1783 = vsel %vm1782, %v1781, %v1679
    %vm1784 = vcmask 23552
    %v1785 = vsel %vm1784, %v1783, %v1779
    %v1786 = vld [vmem:[#allocation2] sm:$0x1]
    %v1788 = vlaneseq
    %v1789 = vshrl.u32 %v1788, 7
    %v1790 = vsub.s32 0, %v1789
    %v1791 = vrot.slane %v1786, %v1790
    %1792 = vset.pattern.permute.xlu0 0
    %1793 = vperm.xlu0 %1792, %v1791
    %v1794 = vpop.permute.xlu0 %1793
    %v1796 = vadd.f32 %v1785, %v1794
    %vm1797 = vcmask 25600
    %1798 = vst.msk [vmem:[#allocation9] sm:$0x3] %vm1797, %v1796
    // Predicated region
    $region46: #{lstm_model_forward.1} parent=1 // pred_check
      _
    $region47: #{lstm_model_forward.1} parent=1 // pred_check_branch
      %1800 = sbr.rel (0) target = $region49
    $region48: #{lstm_model_forward.1} parent=1 // pred_region
      %s1802 = ssub.s32 32, 32
      %1803 = vsyncadd [#allocation5], %s1802
      %s1805 = sshll.u32 [#allocation9], 4
      %s1806 = int_to_ptr.vmem [resolvable:$true] %s1805
      %1808 = dma.vmem_to_hbm [thread:$0]  %s1806, 32, %s8, [#allocation5]
    $region49: #{lstm_model_forward.1} parent=1 // pred_fallthru
      _
    // Predicated region
    $region50: #{lstm_model_forward.1} parent=1 // pred_check
      _
    $region51: #{lstm_model_forward.1} parent=1 // pred_check_branch
      %1810 = sbr.rel (0) target = $region53
    $region52: #{lstm_model_forward.1} parent=1 // pred_region
      %1811 = dma.done [#allocation5], 32
    $region53: #{lstm_model_forward.1} parent=1 // pred_fallthru
      _
    %1812 = vsyncpa [#allocation4], 1
    %1813 = vsyncpa [#allocation7], 1
    %1814 = vsyncpa [#allocation5], 1

</llo_original>
